<compile_context>
chip_gen: v7x
topology: tpu7x:2x2x1
jax: 0.10.0
libtpu: 0.0.40
codegen_flags: <defaults>
</compile_context>

<pallas_src>
import functools
import math

import jax
import jax.numpy as jnp
from jax.experimental import pallas as pl
from jax.experimental.pallas import tpu as pltpu


def _layernorm(x, gamma, beta, eps=1e-6):
    # x: (R, D) float32; gamma/beta: (1, D) float32
    mu = jnp.mean(x, axis=-1, keepdims=True)
    xc = x - mu
    var = jnp.mean(xc * xc, axis=-1, keepdims=True)
    inv = jax.lax.rsqrt(var + eps)
    return xc * inv * gamma + beta


def _gelu_exact(x):
    # PyTorch nn.GELU() default (erf-based), computed in float32.
    return 0.5 * x * (1.0 + jax.lax.erf(x * (1.0 / math.sqrt(2.0))))


def encoder_kernel(x_ref,
                   ln1_g_ref, ln1_b_ref,
                   qkv_w_ref, qkv_b_ref,
                   proj_w_ref, proj_b_ref,
                   ln2_g_ref, ln2_b_ref,
                   fc1_w_ref, fc1_b_ref,
                   fc2_w_ref, fc2_b_ref,
                   o_ref,
                   *, n_heads, n_tokens):
    x = x_ref[...]                      # (B*N, D) float32, batch folded in rows
    BN, D = x.shape
    B = BN // n_tokens
    hd = D // n_heads

    # ---------------- Attention branch ----------------
    h = _layernorm(x, ln1_g_ref[...], ln1_b_ref[...])                    # f32 (BN, D)
    # 1/sqrt(hd) scale already folded into the Q columns of qkv_w / qkv_b.
    qkv = jnp.dot(h.astype(jnp.bfloat16), qkv_w_ref[...],
                  preferred_element_type=jnp.float32) + qkv_b_ref[...]   # (BN, 3D) f32

    proj_w = proj_w_ref[...]                                             # (D, D) bf16

    # Attention mixes tokens only within a sample -> static loop over B
    # samples; per-head loop with the output projection fused in (no ctx
    # concat, no separate proj GEMM).
    sample_outs = []
    for b in range(B):
        r0 = b * n_tokens
        qkv_s = qkv[r0:r0 + n_tokens, :]                                 # (N, 3D) f32
        acc = jnp.zeros((n_tokens, D), jnp.float32)
        for hh in range(n_heads):
            q_h = qkv_s[:, hh * hd:(hh + 1) * hd].astype(jnp.bfloat16)
            k_h = qkv_s[:, D + hh * hd:D + (hh + 1) * hd].astype(jnp.bfloat16)
            v_h = qkv_s[:, 2 * D + hh * hd:2 * D + (hh + 1) * hd].astype(jnp.bfloat16)

            # scores[i, j] = sum_d q_h[i, d] * k_h[j, d]   (contract last dims)
            s = jax.lax.dot_general(q_h, k_h, (((1,), (1,)), ((), ())),
                                    preferred_element_type=jnp.float32)  # (N, N) f32
            s = s - jnp.max(s, axis=-1, keepdims=True)
            p = jnp.exp(s)
            denom = jnp.sum(p, axis=-1, keepdims=True)
            p = p * pl.reciprocal(denom, approx=True)                    # EUP

            ctx_h = jnp.dot(p.astype(jnp.bfloat16), v_h,
                            preferred_element_type=jnp.float32)          # (N, hd) f32
            # Fused output projection: per-head slice of proj_w rows.
            acc = acc + jnp.dot(ctx_h.astype(jnp.bfloat16),
                                proj_w[hh * hd:(hh + 1) * hd, :],
                                preferred_element_type=jnp.float32)      # (N, D) f32
        sample_outs.append(acc)

    attn_out = jnp.concatenate(sample_outs, axis=0) + proj_b_ref[...]    # (BN, D) f32
    x1 = x + attn_out                                                    # f32 residual

    # ---------------- MLP branch ----------------
    h2 = _layernorm(x1, ln2_g_ref[...], ln2_b_ref[...])
    m = jnp.dot(h2.astype(jnp.bfloat16), fc1_w_ref[...],
                preferred_element_type=jnp.float32) + fc1_b_ref[...]     # (BN, Hm) f32
    m = _gelu_exact(m)                                                   # f32 (exact erf)
    m = jnp.dot(m.astype(jnp.bfloat16), fc2_w_ref[...],
                preferred_element_type=jnp.float32) + fc2_b_ref[...]     # (BN, D) f32
    o_ref[...] = (x1 + m).astype(o_ref.dtype)


def transformer_encoder(x, params, n_heads):
    B, N, D = x.shape
    Hm = params['fc1_w'].shape[1]      # MLP hidden features
    hd = D // n_heads
    scale = 1.0 / math.sqrt(hd)

    bf16 = lambda a: a.astype(jnp.bfloat16)
    f32 = lambda a: a.astype(jnp.float32)

    # One-time host-side fold of the attention scale into the Q columns of
    # the qkv projection weight and bias (q*scale == h @ (Wq*scale) + bq*scale).
    col_scale = jnp.concatenate(
        [jnp.full((1, D), scale, jnp.float32), jnp.ones((1, 2 * D), jnp.float32)],
        axis=-1)
    qkv_w = bf16(f32(params['qkv_w']) * col_scale)
    qkv_b = f32(params['qkv_b']) * col_scale

    # Whole-array, single-buffered VMEM residency for weights / biases / LN params.
    wspec = pl.BlockSpec(memory_space=pltpu.MemorySpace.VMEM)
    # Batch folded into rows -> one (B*N, D) block, single grid step.
    xo_spec = pl.BlockSpec((B * N, D), lambda i: (0, 0))
    in_specs = [xo_spec] + [wspec] * 12

    # Advisory cost estimate for XLA scheduling around the custom call.
    flops_per_sample = (2 * N * D * 3 * D        # qkv
                        + 4 * N * N * D          # scores + ctx
                        + 2 * N * D * D          # fused proj
                        + 4 * N * D * Hm)        # fc1 + fc2
    transc_per_sample = n_heads * N * N + N * Hm + 2 * N + n_heads * N
    weight_bytes = 2 * (D * 3 * D + D * D + D * Hm + Hm * D)   # bf16 weights
    other_bytes = 4 * (3 * D + D + Hm + D + 4 * D)             # f32 biases + LN
    cost = pl.CostEstimate(flops=B * flops_per_sample,
                           transcendentals=B * transc_per_sample,
                           bytes_accessed=2 * B * N * D * 4 + weight_bytes + other_bytes)

    kernel = functools.partial(encoder_kernel, n_heads=n_heads, n_tokens=N)

    out2d = pl.pallas_call(
        kernel,
        out_shape=jax.ShapeDtypeStruct((B * N, D), jnp.float32),
        grid_spec=pltpu.PrefetchScalarGridSpec(
            num_scalar_prefetch=0,
            grid=(1,),
            in_specs=in_specs,
            out_specs=xo_spec,
        ),
        compiler_params=pltpu.CompilerParams(
            dimension_semantics=("arbitrary",),
            # Actual footprint here is <1 MiB; cap well below v7x's 64 MiB
            # physical per-TC VMEM to leave headroom for Mosaic scratch.
            vmem_limit_bytes=40 * 1024 * 1024),
        cost_estimate=cost,
    )(f32(x).reshape(B * N, D),
      f32(params['ln1_g']), f32(params['ln1_b']),
      qkv_w, qkv_b,
      bf16(params['proj_w']), f32(params['proj_b']),
      f32(params['ln2_g']), f32(params['ln2_b']),
      bf16(params['fc1_w']), f32(params['fc1_b']),
      bf16(params['fc2_w']), f32(params['fc2_b']))

    return out2d.reshape(B, N, D)


def reference(x, p, n_heads):
    # Pure-JAX float32 reference matching the PyTorch forward.
    B, N, D = x.shape
    hd = D // n_heads

    def ln(v, g, b):
        mu = jnp.mean(v, -1, keepdims=True)
        var = jnp.mean((v - mu) ** 2, -1, keepdims=True)
        return (v - mu) / jnp.sqrt(var + 1e-6) * g + b

    h = ln(x, p['ln1_g'], p['ln1_b'])
    qkv = h @ p['qkv_w'] + p['qkv_b']
    q, k, v = jnp.split(qkv, 3, axis=-1)
    q = q.reshape(B, N, n_heads, hd).transpose(0, 2, 1, 3)
    k = k.reshape(B, N, n_heads, hd).transpose(0, 2, 1, 3)
    v = v.reshape(B, N, n_heads, hd).transpose(0, 2, 1, 3)
    s = jnp.einsum('bhqd,bhkd->bhqk', q, k) / math.sqrt(hd)
    a = jax.nn.softmax(s, axis=-1)
    ctx = jnp.einsum('bhqk,bhkd->bhqd', a, v).transpose(0, 2, 1, 3).reshape(B, N, D)
    x1 = x + ctx @ p['proj_w'] + p['proj_b']
    h2 = ln(x1, p['ln2_g'], p['ln2_b'])
    m = jax.nn.gelu(h2 @ p['fc1_w'] + p['fc1_b'], approximate=False)
    return x1 + m @ p['fc2_w'] + p['fc2_b']


if __name__ == "__main__":
    # Small config consistent with the module's forward signature
    B, N, D = 2, 8, 32           # (n_samples, n_patches+1, dim)
    n_heads = 4
    mlp_ratio = 4.0
    Hm = int(D * mlp_ratio)

    key = jax.random.PRNGKey(0)
    ks = jax.random.split(key, 8)

    def init(k, shape, scale=0.02):
        return (scale * jax.random.normal(k, shape)).astype(jnp.float32)

    params = {
        'ln1_g': jnp.ones((1, D), jnp.float32),
        'ln1_b': jnp.zeros((1, D), jnp.float32),
        'qkv_w': init(ks[0], (D, 3 * D)),
        'qkv_b': init(ks[1], (1, 3 * D)),
        'proj_w': init(ks[2], (D, D)),
        'proj_b': init(ks[3], (1, D)),
        'ln2_g': jnp.ones((1, D), jnp.float32),
        'ln2_b': jnp.zeros((1, D), jnp.float32),
        'fc1_w': init(ks[4], (D, Hm)),
        'fc1_b': init(ks[5], (1, Hm)),
        'fc2_w': init(ks[6], (Hm, D)),
        'fc2_b': init(ks[7], (1, D)),
    }

    x = jax.random.normal(jax.random.PRNGKey(42), (B, N, D), jnp.float32)

    out = transformer_encoder(x, params, n_heads)
    out = jax.block_until_ready(out)

    ref = reference(x, params, n_heads)
    assert out.shape == (B, N, D)
    # bf16 GEMM operands (f32 accumulation) + approx softmax reciprocal
    # -> relaxed tolerance vs the pure-f32 reference.
    assert jnp.allclose(out, ref, atol=2e-2, rtol=2e-2), \
        f"max err {jnp.max(jnp.abs(out - ref))}"
    print("KERNEL_OK")
</pallas_src>

<mosaic_0001>
module attributes {stable_mosaic.version = 11 : i64} {
  func.func @encoder_kernel(%arg0: i32, %arg1: memref<16x32xf32, #tpu.memory_space<vmem>>, %arg2: memref<1x32xf32, #tpu.memory_space<vmem>>, %arg3: memref<1x32xf32, #tpu.memory_space<vmem>>, %arg4: memref<32x96xbf16, #tpu.memory_space<vmem>>, %arg5: memref<1x96xf32, #tpu.memory_space<vmem>>, %arg6: memref<32x32xbf16, #tpu.memory_space<vmem>>, %arg7: memref<1x32xf32, #tpu.memory_space<vmem>>, %arg8: memref<1x32xf32, #tpu.memory_space<vmem>>, %arg9: memref<1x32xf32, #tpu.memory_space<vmem>>, %arg10: memref<32x128xbf16, #tpu.memory_space<vmem>>, %arg11: memref<1x128xf32, #tpu.memory_space<vmem>>, %arg12: memref<128x32xbf16, #tpu.memory_space<vmem>>, %arg13: memref<1x32xf32, #tpu.memory_space<vmem>>, %arg14: memref<16x32xf32, #tpu.memory_space<vmem>>) attributes {dimension_semantics = [#tpu.dimension_semantics<arbitrary>], iteration_bounds = array<i64: 1>, scalar_prefetch = 0 : i64, scratch_operands = 0 : i64, tpu.core_type = #tpu.core_type<tc>, window_params = [{pipeline_mode = #tpu.pipeline_mode<synchronous>, transform_indices = @transform_0, window_bounds = array<i64: 16, 32>}, {pipeline_mode = #tpu.pipeline_mode<synchronous>, transform_indices = @transform_1, window_bounds = array<i64: 1, 32>}, {pipeline_mode = #tpu.pipeline_mode<synchronous>, transform_indices = @transform_2, window_bounds = array<i64: 1, 32>}, {pipeline_mode = #tpu.pipeline_mode<synchronous>, transform_indices = @transform_3, window_bounds = array<i64: 32, 96>}, {pipeline_mode = #tpu.pipeline_mode<synchronous>, transform_indices = @transform_4, window_bounds = array<i64: 1, 96>}, {pipeline_mode = #tpu.pipeline_mode<synchronous>, transform_indices = @transform_5, window_bounds = array<i64: 32, 32>}, {pipeline_mode = #tpu.pipeline_mode<synchronous>, transform_indices = @transform_6, window_bounds = array<i64: 1, 32>}, {pipeline_mode = #tpu.pipeline_mode<synchronous>, transform_indices = @transform_7, window_bounds = array<i64: 1, 32>}, {pipeline_mode = #tpu.pipeline_mode<synchronous>, transform_indices = @transform_8, window_bounds = array<i64: 1, 32>}, {pipeline_mode = #tpu.pipeline_mode<synchronous>, transform_indices = @transform_9, window_bounds = array<i64: 32, 128>}, {pipeline_mode = #tpu.pipeline_mode<synchronous>, transform_indices = @transform_10, window_bounds = array<i64: 1, 128>}, {pipeline_mode = #tpu.pipeline_mode<synchronous>, transform_indices = @transform_11, window_bounds = array<i64: 128, 32>}, {pipeline_mode = #tpu.pipeline_mode<synchronous>, transform_indices = @transform_12, window_bounds = array<i64: 1, 32>}, {pipeline_mode = #tpu.pipeline_mode<synchronous>, transform_indices = @transform_13, window_bounds = array<i64: 16, 32>}]} {
    %c0 = arith.constant 0 : index
    %c0_0 = arith.constant 0 : index
    %0 = vector.load %arg1[%c0, %c0_0] : memref<16x32xf32, #tpu.memory_space<vmem>>, vector<16x32xf32>
    %c0_1 = arith.constant 0 : index
    %c0_2 = arith.constant 0 : index
    %1 = vector.load %arg2[%c0_1, %c0_2] : memref<1x32xf32, #tpu.memory_space<vmem>>, vector<1x32xf32>
    %c0_3 = arith.constant 0 : index
    %c0_4 = arith.constant 0 : index
    %2 = vector.load %arg3[%c0_3, %c0_4] : memref<1x32xf32, #tpu.memory_space<vmem>>, vector<1x32xf32>
    %cst = arith.constant dense<0.000000e+00> : vector<16xf32>
    %3 = vector.multi_reduction <add>, %0, %cst [1] : vector<16x32xf32> to vector<16xf32>
    %4 = vector.shape_cast %3 : vector<16xf32> to vector<16x1xf32>
    %cst_5 = arith.constant 3.200000e+01 : f32
    %5 = vector.broadcast %cst_5 : f32 to vector<16x1xf32>
    %6 = arith.divf %4, %5 : vector<16x1xf32>
    %7 = vector.broadcast %6 : vector<16x1xf32> to vector<16x32xf32>
    %8 = arith.subf %0, %7 : vector<16x32xf32>
    %9 = arith.mulf %8, %8 : vector<16x32xf32>
    %cst_6 = arith.constant dense<0.000000e+00> : vector<16xf32>
    %10 = vector.multi_reduction <add>, %9, %cst_6 [1] : vector<16x32xf32> to vector<16xf32>
    %11 = vector.shape_cast %10 : vector<16xf32> to vector<16x1xf32>
    %cst_7 = arith.constant 3.200000e+01 : f32
    %12 = vector.broadcast %cst_7 : f32 to vector<16x1xf32>
    %13 = arith.divf %11, %12 : vector<16x1xf32>
    %cst_8 = arith.constant 9.99999997E-7 : f32
    %14 = vector.broadcast %cst_8 : f32 to vector<16x1xf32>
    %15 = arith.addf %13, %14 : vector<16x1xf32>
    %16 = math.rsqrt %15 : vector<16x1xf32>
    %17 = vector.broadcast %16 : vector<16x1xf32> to vector<16x32xf32>
    %18 = arith.mulf %8, %17 : vector<16x32xf32>
    %19 = vector.broadcast %1 : vector<1x32xf32> to vector<16x32xf32>
    %20 = arith.mulf %18, %19 : vector<16x32xf32>
    %21 = vector.broadcast %2 : vector<1x32xf32> to vector<16x32xf32>
    %22 = arith.addf %20, %21 : vector<16x32xf32>
    %23 = arith.truncf %22 : vector<16x32xf32> to vector<16x32xbf16>
    %c0_9 = arith.constant 0 : index
    %c0_10 = arith.constant 0 : index
    %24 = vector.load %arg4[%c0_9, %c0_10] : memref<32x96xbf16, #tpu.memory_space<vmem>>, vector<32x96xbf16>
    %cst_11 = arith.constant dense<0.000000e+00> : vector<16x96xf32>
    %25 = tpu.matmul %23, %24, %cst_11 {dimension_numbers = #tpu.dot_dimension_numbers<[1], [0], [0], [1], [0, 0, 1, 1], [], []>} : vector<16x32xbf16>, vector<32x96xbf16>, vector<16x96xf32> -> vector<16x96xf32>
    %c0_12 = arith.constant 0 : index
    %c0_13 = arith.constant 0 : index
    %26 = vector.load %arg5[%c0_12, %c0_13] : memref<1x96xf32, #tpu.memory_space<vmem>>, vector<1x96xf32>
    %27 = vector.broadcast %26 : vector<1x96xf32> to vector<16x96xf32>
    %28 = arith.addf %25, %27 : vector<16x96xf32>
    %c0_14 = arith.constant 0 : index
    %c0_15 = arith.constant 0 : index
    %29 = vector.load %arg6[%c0_14, %c0_15] : memref<32x32xbf16, #tpu.memory_space<vmem>>, vector<32x32xbf16>
    %30 = vector.extract_strided_slice %28 {offsets = [0, 0], sizes = [8, 96], strides = [1, 1]} : vector<16x96xf32> to vector<8x96xf32>
    %cst_16 = arith.constant 0.000000e+00 : f32
    %31 = vector.broadcast %cst_16 : f32 to vector<8x32xf32>
    %32 = vector.extract_strided_slice %30 {offsets = [0, 0], sizes = [8, 8], strides = [1, 1]} : vector<8x96xf32> to vector<8x8xf32>
    %33 = arith.truncf %32 : vector<8x8xf32> to vector<8x8xbf16>
    %34 = vector.extract_strided_slice %30 {offsets = [0, 32], sizes = [8, 8], strides = [1, 1]} : vector<8x96xf32> to vector<8x8xf32>
    %35 = arith.truncf %34 : vector<8x8xf32> to vector<8x8xbf16>
    %36 = vector.extract_strided_slice %30 {offsets = [0, 64], sizes = [8, 8], strides = [1, 1]} : vector<8x96xf32> to vector<8x8xf32>
    %37 = arith.truncf %36 : vector<8x8xf32> to vector<8x8xbf16>
    %cst_17 = arith.constant dense<0.000000e+00> : vector<8x8xf32>
    %38 = tpu.matmul %33, %35, %cst_17 {dimension_numbers = #tpu.dot_dimension_numbers<[1], [1], [0], [0], [0, 0, 1, 0], [], []>} : vector<8x8xbf16>, vector<8x8xbf16>, vector<8x8xf32> -> vector<8x8xf32>
    %cst_18 = arith.constant dense<0xFF800000> : vector<8xf32>
    %39 = vector.multi_reduction <maximumf>, %38, %cst_18 [1] : vector<8x8xf32> to vector<8xf32>
    %40 = vector.shape_cast %39 : vector<8xf32> to vector<8x1xf32>
    %41 = vector.broadcast %40 : vector<8x1xf32> to vector<8x8xf32>
    %42 = arith.subf %38, %41 : vector<8x8xf32>
    %43 = math.exp %42 : vector<8x8xf32>
    %cst_19 = arith.constant dense<0.000000e+00> : vector<8xf32>
    %44 = vector.multi_reduction <add>, %43, %cst_19 [1] : vector<8x8xf32> to vector<8xf32>
    %45 = vector.shape_cast %44 : vector<8xf32> to vector<8x1xf32>
    %46 = tpu.reciprocal %45 {approx = true} : vector<8x1xf32> -> vector<8x1xf32>
    %47 = vector.broadcast %46 : vector<8x1xf32> to vector<8x8xf32>
    %48 = arith.mulf %43, %47 : vector<8x8xf32>
    %49 = arith.truncf %48 : vector<8x8xf32> to vector<8x8xbf16>
    %cst_20 = arith.constant dense<0.000000e+00> : vector<8x8xf32>
    %50 = tpu.matmul %49, %37, %cst_20 {dimension_numbers = #tpu.dot_dimension_numbers<[1], [0], [0], [1], [0, 0, 1, 1], [], []>} : vector<8x8xbf16>, vector<8x8xbf16>, vector<8x8xf32> -> vector<8x8xf32>
    %51 = arith.truncf %50 : vector<8x8xf32> to vector<8x8xbf16>
    %52 = vector.extract_strided_slice %29 {offsets = [0, 0], sizes = [8, 32], strides = [1, 1]} : vector<32x32xbf16> to vector<8x32xbf16>
    %cst_21 = arith.constant dense<0.000000e+00> : vector<8x32xf32>
    %53 = tpu.matmul %51, %52, %cst_21 {dimension_numbers = #tpu.dot_dimension_numbers<[1], [0], [0], [1], [0, 0, 1, 1], [], []>} : vector<8x8xbf16>, vector<8x32xbf16>, vector<8x32xf32> -> vector<8x32xf32>
    %54 = arith.addf %31, %53 : vector<8x32xf32>
    %55 = vector.extract_strided_slice %30 {offsets = [0, 8], sizes = [8, 8], strides = [1, 1]} : vector<8x96xf32> to vector<8x8xf32>
    %56 = arith.truncf %55 : vector<8x8xf32> to vector<8x8xbf16>
    %57 = vector.extract_strided_slice %30 {offsets = [0, 40], sizes = [8, 8], strides = [1, 1]} : vector<8x96xf32> to vector<8x8xf32>
    %58 = arith.truncf %57 : vector<8x8xf32> to vector<8x8xbf16>
    %59 = vector.extract_strided_slice %30 {offsets = [0, 72], sizes = [8, 8], strides = [1, 1]} : vector<8x96xf32> to vector<8x8xf32>
    %60 = arith.truncf %59 : vector<8x8xf32> to vector<8x8xbf16>
    %cst_22 = arith.constant dense<0.000000e+00> : vector<8x8xf32>
    %61 = tpu.matmul %56, %58, %cst_22 {dimension_numbers = #tpu.dot_dimension_numbers<[1], [1], [0], [0], [0, 0, 1, 0], [], []>} : vector<8x8xbf16>, vector<8x8xbf16>, vector<8x8xf32> -> vector<8x8xf32>
    %cst_23 = arith.constant dense<0xFF800000> : vector<8xf32>
    %62 = vector.multi_reduction <maximumf>, %61, %cst_23 [1] : vector<8x8xf32> to vector<8xf32>
    %63 = vector.shape_cast %62 : vector<8xf32> to vector<8x1xf32>
    %64 = vector.broadcast %63 : vector<8x1xf32> to vector<8x8xf32>
    %65 = arith.subf %61, %64 : vector<8x8xf32>
    %66 = math.exp %65 : vector<8x8xf32>
    %cst_24 = arith.constant dense<0.000000e+00> : vector<8xf32>
    %67 = vector.multi_reduction <add>, %66, %cst_24 [1] : vector<8x8xf32> to vector<8xf32>
    %68 = vector.shape_cast %67 : vector<8xf32> to vector<8x1xf32>
    %69 = tpu.reciprocal %68 {approx = true} : vector<8x1xf32> -> vector<8x1xf32>
    %70 = vector.broadcast %69 : vector<8x1xf32> to vector<8x8xf32>
    %71 = arith.mulf %66, %70 : vector<8x8xf32>
    %72 = arith.truncf %71 : vector<8x8xf32> to vector<8x8xbf16>
    %cst_25 = arith.constant dense<0.000000e+00> : vector<8x8xf32>
    %73 = tpu.matmul %72, %60, %cst_25 {dimension_numbers = #tpu.dot_dimension_numbers<[1], [0], [0], [1], [0, 0, 1, 1], [], []>} : vector<8x8xbf16>, vector<8x8xbf16>, vector<8x8xf32> -> vector<8x8xf32>
    %74 = arith.truncf %73 : vector<8x8xf32> to vector<8x8xbf16>
    %75 = vector.extract_strided_slice %29 {offsets = [8, 0], sizes = [8, 32], strides = [1, 1]} : vector<32x32xbf16> to vector<8x32xbf16>
    %cst_26 = arith.constant dense<0.000000e+00> : vector<8x32xf32>
    %76 = tpu.matmul %74, %75, %cst_26 {dimension_numbers = #tpu.dot_dimension_numbers<[1], [0], [0], [1], [0, 0, 1, 1], [], []>} : vector<8x8xbf16>, vector<8x32xbf16>, vector<8x32xf32> -> vector<8x32xf32>
    %77 = arith.addf %54, %76 : vector<8x32xf32>
    %78 = vector.extract_strided_slice %30 {offsets = [0, 16], sizes = [8, 8], strides = [1, 1]} : vector<8x96xf32> to vector<8x8xf32>
    %79 = arith.truncf %78 : vector<8x8xf32> to vector<8x8xbf16>
    %80 = vector.extract_strided_slice %30 {offsets = [0, 48], sizes = [8, 8], strides = [1, 1]} : vector<8x96xf32> to vector<8x8xf32>
    %81 = arith.truncf %80 : vector<8x8xf32> to vector<8x8xbf16>
    %82 = vector.extract_strided_slice %30 {offsets = [0, 80], sizes = [8, 8], strides = [1, 1]} : vector<8x96xf32> to vector<8x8xf32>
    %83 = arith.truncf %82 : vector<8x8xf32> to vector<8x8xbf16>
    %cst_27 = arith.constant dense<0.000000e+00> : vector<8x8xf32>
    %84 = tpu.matmul %79, %81, %cst_27 {dimension_numbers = #tpu.dot_dimension_numbers<[1], [1], [0], [0], [0, 0, 1, 0], [], []>} : vector<8x8xbf16>, vector<8x8xbf16>, vector<8x8xf32> -> vector<8x8xf32>
    %cst_28 = arith.constant dense<0xFF800000> : vector<8xf32>
    %85 = vector.multi_reduction <maximumf>, %84, %cst_28 [1] : vector<8x8xf32> to vector<8xf32>
    %86 = vector.shape_cast %85 : vector<8xf32> to vector<8x1xf32>
    %87 = vector.broadcast %86 : vector<8x1xf32> to vector<8x8xf32>
    %88 = arith.subf %84, %87 : vector<8x8xf32>
    %89 = math.exp %88 : vector<8x8xf32>
    %cst_29 = arith.constant dense<0.000000e+00> : vector<8xf32>
    %90 = vector.multi_reduction <add>, %89, %cst_29 [1] : vector<8x8xf32> to vector<8xf32>
    %91 = vector.shape_cast %90 : vector<8xf32> to vector<8x1xf32>
    %92 = tpu.reciprocal %91 {approx = true} : vector<8x1xf32> -> vector<8x1xf32>
    %93 = vector.broadcast %92 : vector<8x1xf32> to vector<8x8xf32>
    %94 = arith.mulf %89, %93 : vector<8x8xf32>
    %95 = arith.truncf %94 : vector<8x8xf32> to vector<8x8xbf16>
    %cst_30 = arith.constant dense<0.000000e+00> : vector<8x8xf32>
    %96 = tpu.matmul %95, %83, %cst_30 {dimension_numbers = #tpu.dot_dimension_numbers<[1], [0], [0], [1], [0, 0, 1, 1], [], []>} : vector<8x8xbf16>, vector<8x8xbf16>, vector<8x8xf32> -> vector<8x8xf32>
    %97 = arith.truncf %96 : vector<8x8xf32> to vector<8x8xbf16>
    %98 = vector.extract_strided_slice %29 {offsets = [16, 0], sizes = [8, 32], strides = [1, 1]} : vector<32x32xbf16> to vector<8x32xbf16>
    %cst_31 = arith.constant dense<0.000000e+00> : vector<8x32xf32>
    %99 = tpu.matmul %97, %98, %cst_31 {dimension_numbers = #tpu.dot_dimension_numbers<[1], [0], [0], [1], [0, 0, 1, 1], [], []>} : vector<8x8xbf16>, vector<8x32xbf16>, vector<8x32xf32> -> vector<8x32xf32>
    %100 = arith.addf %77, %99 : vector<8x32xf32>
    %101 = vector.extract_strided_slice %30 {offsets = [0, 24], sizes = [8, 8], strides = [1, 1]} : vector<8x96xf32> to vector<8x8xf32>
    %102 = arith.truncf %101 : vector<8x8xf32> to vector<8x8xbf16>
    %103 = vector.extract_strided_slice %30 {offsets = [0, 56], sizes = [8, 8], strides = [1, 1]} : vector<8x96xf32> to vector<8x8xf32>
    %104 = arith.truncf %103 : vector<8x8xf32> to vector<8x8xbf16>
    %105 = vector.extract_strided_slice %30 {offsets = [0, 88], sizes = [8, 8], strides = [1, 1]} : vector<8x96xf32> to vector<8x8xf32>
    %106 = arith.truncf %105 : vector<8x8xf32> to vector<8x8xbf16>
    %cst_32 = arith.constant dense<0.000000e+00> : vector<8x8xf32>
    %107 = tpu.matmul %102, %104, %cst_32 {dimension_numbers = #tpu.dot_dimension_numbers<[1], [1], [0], [0], [0, 0, 1, 0], [], []>} : vector<8x8xbf16>, vector<8x8xbf16>, vector<8x8xf32> -> vector<8x8xf32>
    %cst_33 = arith.constant dense<0xFF800000> : vector<8xf32>
    %108 = vector.multi_reduction <maximumf>, %107, %cst_33 [1] : vector<8x8xf32> to vector<8xf32>
    %109 = vector.shape_cast %108 : vector<8xf32> to vector<8x1xf32>
    %110 = vector.broadcast %109 : vector<8x1xf32> to vector<8x8xf32>
    %111 = arith.subf %107, %110 : vector<8x8xf32>
    %112 = math.exp %111 : vector<8x8xf32>
    %cst_34 = arith.constant dense<0.000000e+00> : vector<8xf32>
    %113 = vector.multi_reduction <add>, %112, %cst_34 [1] : vector<8x8xf32> to vector<8xf32>
    %114 = vector.shape_cast %113 : vector<8xf32> to vector<8x1xf32>
    %115 = tpu.reciprocal %114 {approx = true} : vector<8x1xf32> -> vector<8x1xf32>
    %116 = vector.broadcast %115 : vector<8x1xf32> to vector<8x8xf32>
    %117 = arith.mulf %112, %116 : vector<8x8xf32>
    %118 = arith.truncf %117 : vector<8x8xf32> to vector<8x8xbf16>
    %cst_35 = arith.constant dense<0.000000e+00> : vector<8x8xf32>
    %119 = tpu.matmul %118, %106, %cst_35 {dimension_numbers = #tpu.dot_dimension_numbers<[1], [0], [0], [1], [0, 0, 1, 1], [], []>} : vector<8x8xbf16>, vector<8x8xbf16>, vector<8x8xf32> -> vector<8x8xf32>
    %120 = arith.truncf %119 : vector<8x8xf32> to vector<8x8xbf16>
    %121 = vector.extract_strided_slice %29 {offsets = [24, 0], sizes = [8, 32], strides = [1, 1]} : vector<32x32xbf16> to vector<8x32xbf16>
    %cst_36 = arith.constant dense<0.000000e+00> : vector<8x32xf32>
    %122 = tpu.matmul %120, %121, %cst_36 {dimension_numbers = #tpu.dot_dimension_numbers<[1], [0], [0], [1], [0, 0, 1, 1], [], []>} : vector<8x8xbf16>, vector<8x32xbf16>, vector<8x32xf32> -> vector<8x32xf32>
    %123 = arith.addf %100, %122 : vector<8x32xf32>
    %124 = vector.extract_strided_slice %28 {offsets = [8, 0], sizes = [8, 96], strides = [1, 1]} : vector<16x96xf32> to vector<8x96xf32>
    %cst_37 = arith.constant 0.000000e+00 : f32
    %125 = vector.broadcast %cst_37 : f32 to vector<8x32xf32>
    %126 = vector.extract_strided_slice %124 {offsets = [0, 0], sizes = [8, 8], strides = [1, 1]} : vector<8x96xf32> to vector<8x8xf32>
    %127 = arith.truncf %126 : vector<8x8xf32> to vector<8x8xbf16>
    %128 = vector.extract_strided_slice %124 {offsets = [0, 32], sizes = [8, 8], strides = [1, 1]} : vector<8x96xf32> to vector<8x8xf32>
    %129 = arith.truncf %128 : vector<8x8xf32> to vector<8x8xbf16>
    %130 = vector.extract_strided_slice %124 {offsets = [0, 64], sizes = [8, 8], strides = [1, 1]} : vector<8x96xf32> to vector<8x8xf32>
    %131 = arith.truncf %130 : vector<8x8xf32> to vector<8x8xbf16>
    %cst_38 = arith.constant dense<0.000000e+00> : vector<8x8xf32>
    %132 = tpu.matmul %127, %129, %cst_38 {dimension_numbers = #tpu.dot_dimension_numbers<[1], [1], [0], [0], [0, 0, 1, 0], [], []>} : vector<8x8xbf16>, vector<8x8xbf16>, vector<8x8xf32> -> vector<8x8xf32>
    %cst_39 = arith.constant dense<0xFF800000> : vector<8xf32>
    %133 = vector.multi_reduction <maximumf>, %132, %cst_39 [1] : vector<8x8xf32> to vector<8xf32>
    %134 = vector.shape_cast %133 : vector<8xf32> to vector<8x1xf32>
    %135 = vector.broadcast %134 : vector<8x1xf32> to vector<8x8xf32>
    %136 = arith.subf %132, %135 : vector<8x8xf32>
    %137 = math.exp %136 : vector<8x8xf32>
    %cst_40 = arith.constant dense<0.000000e+00> : vector<8xf32>
    %138 = vector.multi_reduction <add>, %137, %cst_40 [1] : vector<8x8xf32> to vector<8xf32>
    %139 = vector.shape_cast %138 : vector<8xf32> to vector<8x1xf32>
    %140 = tpu.reciprocal %139 {approx = true} : vector<8x1xf32> -> vector<8x1xf32>
    %141 = vector.broadcast %140 : vector<8x1xf32> to vector<8x8xf32>
    %142 = arith.mulf %137, %141 : vector<8x8xf32>
    %143 = arith.truncf %142 : vector<8x8xf32> to vector<8x8xbf16>
    %cst_41 = arith.constant dense<0.000000e+00> : vector<8x8xf32>
    %144 = tpu.matmul %143, %131, %cst_41 {dimension_numbers = #tpu.dot_dimension_numbers<[1], [0], [0], [1], [0, 0, 1, 1], [], []>} : vector<8x8xbf16>, vector<8x8xbf16>, vector<8x8xf32> -> vector<8x8xf32>
    %145 = arith.truncf %144 : vector<8x8xf32> to vector<8x8xbf16>
    %146 = vector.extract_strided_slice %29 {offsets = [0, 0], sizes = [8, 32], strides = [1, 1]} : vector<32x32xbf16> to vector<8x32xbf16>
    %cst_42 = arith.constant dense<0.000000e+00> : vector<8x32xf32>
    %147 = tpu.matmul %145, %146, %cst_42 {dimension_numbers = #tpu.dot_dimension_numbers<[1], [0], [0], [1], [0, 0, 1, 1], [], []>} : vector<8x8xbf16>, vector<8x32xbf16>, vector<8x32xf32> -> vector<8x32xf32>
    %148 = arith.addf %125, %147 : vector<8x32xf32>
    %149 = vector.extract_strided_slice %124 {offsets = [0, 8], sizes = [8, 8], strides = [1, 1]} : vector<8x96xf32> to vector<8x8xf32>
    %150 = arith.truncf %149 : vector<8x8xf32> to vector<8x8xbf16>
    %151 = vector.extract_strided_slice %124 {offsets = [0, 40], sizes = [8, 8], strides = [1, 1]} : vector<8x96xf32> to vector<8x8xf32>
    %152 = arith.truncf %151 : vector<8x8xf32> to vector<8x8xbf16>
    %153 = vector.extract_strided_slice %124 {offsets = [0, 72], sizes = [8, 8], strides = [1, 1]} : vector<8x96xf32> to vector<8x8xf32>
    %154 = arith.truncf %153 : vector<8x8xf32> to vector<8x8xbf16>
    %cst_43 = arith.constant dense<0.000000e+00> : vector<8x8xf32>
    %155 = tpu.matmul %150, %152, %cst_43 {dimension_numbers = #tpu.dot_dimension_numbers<[1], [1], [0], [0], [0, 0, 1, 0], [], []>} : vector<8x8xbf16>, vector<8x8xbf16>, vector<8x8xf32> -> vector<8x8xf32>
    %cst_44 = arith.constant dense<0xFF800000> : vector<8xf32>
    %156 = vector.multi_reduction <maximumf>, %155, %cst_44 [1] : vector<8x8xf32> to vector<8xf32>
    %157 = vector.shape_cast %156 : vector<8xf32> to vector<8x1xf32>
    %158 = vector.broadcast %157 : vector<8x1xf32> to vector<8x8xf32>
    %159 = arith.subf %155, %158 : vector<8x8xf32>
    %160 = math.exp %159 : vector<8x8xf32>
    %cst_45 = arith.constant dense<0.000000e+00> : vector<8xf32>
    %161 = vector.multi_reduction <add>, %160, %cst_45 [1] : vector<8x8xf32> to vector<8xf32>
    %162 = vector.shape_cast %161 : vector<8xf32> to vector<8x1xf32>
    %163 = tpu.reciprocal %162 {approx = true} : vector<8x1xf32> -> vector<8x1xf32>
    %164 = vector.broadcast %163 : vector<8x1xf32> to vector<8x8xf32>
    %165 = arith.mulf %160, %164 : vector<8x8xf32>
    %166 = arith.truncf %165 : vector<8x8xf32> to vector<8x8xbf16>
    %cst_46 = arith.constant dense<0.000000e+00> : vector<8x8xf32>
    %167 = tpu.matmul %166, %154, %cst_46 {dimension_numbers = #tpu.dot_dimension_numbers<[1], [0], [0], [1], [0, 0, 1, 1], [], []>} : vector<8x8xbf16>, vector<8x8xbf16>, vector<8x8xf32> -> vector<8x8xf32>
    %168 = arith.truncf %167 : vector<8x8xf32> to vector<8x8xbf16>
    %169 = vector.extract_strided_slice %29 {offsets = [8, 0], sizes = [8, 32], strides = [1, 1]} : vector<32x32xbf16> to vector<8x32xbf16>
    %cst_47 = arith.constant dense<0.000000e+00> : vector<8x32xf32>
    %170 = tpu.matmul %168, %169, %cst_47 {dimension_numbers = #tpu.dot_dimension_numbers<[1], [0], [0], [1], [0, 0, 1, 1], [], []>} : vector<8x8xbf16>, vector<8x32xbf16>, vector<8x32xf32> -> vector<8x32xf32>
    %171 = arith.addf %148, %170 : vector<8x32xf32>
    %172 = vector.extract_strided_slice %124 {offsets = [0, 16], sizes = [8, 8], strides = [1, 1]} : vector<8x96xf32> to vector<8x8xf32>
    %173 = arith.truncf %172 : vector<8x8xf32> to vector<8x8xbf16>
    %174 = vector.extract_strided_slice %124 {offsets = [0, 48], sizes = [8, 8], strides = [1, 1]} : vector<8x96xf32> to vector<8x8xf32>
    %175 = arith.truncf %174 : vector<8x8xf32> to vector<8x8xbf16>
    %176 = vector.extract_strided_slice %124 {offsets = [0, 80], sizes = [8, 8], strides = [1, 1]} : vector<8x96xf32> to vector<8x8xf32>
    %177 = arith.truncf %176 : vector<8x8xf32> to vector<8x8xbf16>
    %cst_48 = arith.constant dense<0.000000e+00> : vector<8x8xf32>
    %178 = tpu.matmul %173, %175, %cst_48 {dimension_numbers = #tpu.dot_dimension_numbers<[1], [1], [0], [0], [0, 0, 1, 0], [], []>} : vector<8x8xbf16>, vector<8x8xbf16>, vector<8x8xf32> -> vector<8x8xf32>
    %cst_49 = arith.constant dense<0xFF800000> : vector<8xf32>
    %179 = vector.multi_reduction <maximumf>, %178, %cst_49 [1] : vector<8x8xf32> to vector<8xf32>
    %180 = vector.shape_cast %179 : vector<8xf32> to vector<8x1xf32>
    %181 = vector.broadcast %180 : vector<8x1xf32> to vector<8x8xf32>
    %182 = arith.subf %178, %181 : vector<8x8xf32>
    %183 = math.exp %182 : vector<8x8xf32>
    %cst_50 = arith.constant dense<0.000000e+00> : vector<8xf32>
    %184 = vector.multi_reduction <add>, %183, %cst_50 [1] : vector<8x8xf32> to vector<8xf32>
    %185 = vector.shape_cast %184 : vector<8xf32> to vector<8x1xf32>
    %186 = tpu.reciprocal %185 {approx = true} : vector<8x1xf32> -> vector<8x1xf32>
    %187 = vector.broadcast %186 : vector<8x1xf32> to vector<8x8xf32>
    %188 = arith.mulf %183, %187 : vector<8x8xf32>
    %189 = arith.truncf %188 : vector<8x8xf32> to vector<8x8xbf16>
    %cst_51 = arith.constant dense<0.000000e+00> : vector<8x8xf32>
    %190 = tpu.matmul %189, %177, %cst_51 {dimension_numbers = #tpu.dot_dimension_numbers<[1], [0], [0], [1], [0, 0, 1, 1], [], []>} : vector<8x8xbf16>, vector<8x8xbf16>, vector<8x8xf32> -> vector<8x8xf32>
    %191 = arith.truncf %190 : vector<8x8xf32> to vector<8x8xbf16>
    %192 = vector.extract_strided_slice %29 {offsets = [16, 0], sizes = [8, 32], strides = [1, 1]} : vector<32x32xbf16> to vector<8x32xbf16>
    %cst_52 = arith.constant dense<0.000000e+00> : vector<8x32xf32>
    %193 = tpu.matmul %191, %192, %cst_52 {dimension_numbers = #tpu.dot_dimension_numbers<[1], [0], [0], [1], [0, 0, 1, 1], [], []>} : vector<8x8xbf16>, vector<8x32xbf16>, vector<8x32xf32> -> vector<8x32xf32>
    %194 = arith.addf %171, %193 : vector<8x32xf32>
    %195 = vector.extract_strided_slice %124 {offsets = [0, 24], sizes = [8, 8], strides = [1, 1]} : vector<8x96xf32> to vector<8x8xf32>
    %196 = arith.truncf %195 : vector<8x8xf32> to vector<8x8xbf16>
    %197 = vector.extract_strided_slice %124 {offsets = [0, 56], sizes = [8, 8], strides = [1, 1]} : vector<8x96xf32> to vector<8x8xf32>
    %198 = arith.truncf %197 : vector<8x8xf32> to vector<8x8xbf16>
    %199 = vector.extract_strided_slice %124 {offsets = [0, 88], sizes = [8, 8], strides = [1, 1]} : vector<8x96xf32> to vector<8x8xf32>
    %200 = arith.truncf %199 : vector<8x8xf32> to vector<8x8xbf16>
    %cst_53 = arith.constant dense<0.000000e+00> : vector<8x8xf32>
    %201 = tpu.matmul %196, %198, %cst_53 {dimension_numbers = #tpu.dot_dimension_numbers<[1], [1], [0], [0], [0, 0, 1, 0], [], []>} : vector<8x8xbf16>, vector<8x8xbf16>, vector<8x8xf32> -> vector<8x8xf32>
    %cst_54 = arith.constant dense<0xFF800000> : vector<8xf32>
    %202 = vector.multi_reduction <maximumf>, %201, %cst_54 [1] : vector<8x8xf32> to vector<8xf32>
    %203 = vector.shape_cast %202 : vector<8xf32> to vector<8x1xf32>
    %204 = vector.broadcast %203 : vector<8x1xf32> to vector<8x8xf32>
    %205 = arith.subf %201, %204 : vector<8x8xf32>
    %206 = math.exp %205 : vector<8x8xf32>
    %cst_55 = arith.constant dense<0.000000e+00> : vector<8xf32>
    %207 = vector.multi_reduction <add>, %206, %cst_55 [1] : vector<8x8xf32> to vector<8xf32>
    %208 = vector.shape_cast %207 : vector<8xf32> to vector<8x1xf32>
    %209 = tpu.reciprocal %208 {approx = true} : vector<8x1xf32> -> vector<8x1xf32>
    %210 = vector.broadcast %209 : vector<8x1xf32> to vector<8x8xf32>
    %211 = arith.mulf %206, %210 : vector<8x8xf32>
    %212 = arith.truncf %211 : vector<8x8xf32> to vector<8x8xbf16>
    %cst_56 = arith.constant dense<0.000000e+00> : vector<8x8xf32>
    %213 = tpu.matmul %212, %200, %cst_56 {dimension_numbers = #tpu.dot_dimension_numbers<[1], [0], [0], [1], [0, 0, 1, 1], [], []>} : vector<8x8xbf16>, vector<8x8xbf16>, vector<8x8xf32> -> vector<8x8xf32>
    %214 = arith.truncf %213 : vector<8x8xf32> to vector<8x8xbf16>
    %215 = vector.extract_strided_slice %29 {offsets = [24, 0], sizes = [8, 32], strides = [1, 1]} : vector<32x32xbf16> to vector<8x32xbf16>
    %cst_57 = arith.constant dense<0.000000e+00> : vector<8x32xf32>
    %216 = tpu.matmul %214, %215, %cst_57 {dimension_numbers = #tpu.dot_dimension_numbers<[1], [0], [0], [1], [0, 0, 1, 1], [], []>} : vector<8x8xbf16>, vector<8x32xbf16>, vector<8x32xf32> -> vector<8x32xf32>
    %217 = arith.addf %194, %216 : vector<8x32xf32>
    %218 = tpu.concatenate %123, %217 in 0 : vector<8x32xf32>, vector<8x32xf32> -> vector<16x32xf32>
    %c0_58 = arith.constant 0 : index
    %c0_59 = arith.constant 0 : index
    %219 = vector.load %arg7[%c0_58, %c0_59] : memref<1x32xf32, #tpu.memory_space<vmem>>, vector<1x32xf32>
    %220 = vector.broadcast %219 : vector<1x32xf32> to vector<16x32xf32>
    %221 = arith.addf %218, %220 : vector<16x32xf32>
    %222 = arith.addf %0, %221 : vector<16x32xf32>
    %c0_60 = arith.constant 0 : index
    %c0_61 = arith.constant 0 : index
    %223 = vector.load %arg8[%c0_60, %c0_61] : memref<1x32xf32, #tpu.memory_space<vmem>>, vector<1x32xf32>
    %c0_62 = arith.constant 0 : index
    %c0_63 = arith.constant 0 : index
    %224 = vector.load %arg9[%c0_62, %c0_63] : memref<1x32xf32, #tpu.memory_space<vmem>>, vector<1x32xf32>
    %cst_64 = arith.constant dense<0.000000e+00> : vector<16xf32>
    %225 = vector.multi_reduction <add>, %222, %cst_64 [1] : vector<16x32xf32> to vector<16xf32>
    %226 = vector.shape_cast %225 : vector<16xf32> to vector<16x1xf32>
    %cst_65 = arith.constant 3.200000e+01 : f32
    %227 = vector.broadcast %cst_65 : f32 to vector<16x1xf32>
    %228 = arith.divf %226, %227 : vector<16x1xf32>
    %229 = vector.broadcast %228 : vector<16x1xf32> to vector<16x32xf32>
    %230 = arith.subf %222, %229 : vector<16x32xf32>
    %231 = arith.mulf %230, %230 : vector<16x32xf32>
    %cst_66 = arith.constant dense<0.000000e+00> : vector<16xf32>
    %232 = vector.multi_reduction <add>, %231, %cst_66 [1] : vector<16x32xf32> to vector<16xf32>
    %233 = vector.shape_cast %232 : vector<16xf32> to vector<16x1xf32>
    %cst_67 = arith.constant 3.200000e+01 : f32
    %234 = vector.broadcast %cst_67 : f32 to vector<16x1xf32>
    %235 = arith.divf %233, %234 : vector<16x1xf32>
    %cst_68 = arith.constant 9.99999997E-7 : f32
    %236 = vector.broadcast %cst_68 : f32 to vector<16x1xf32>
    %237 = arith.addf %235, %236 : vector<16x1xf32>
    %238 = math.rsqrt %237 : vector<16x1xf32>
    %239 = vector.broadcast %238 : vector<16x1xf32> to vector<16x32xf32>
    %240 = arith.mulf %230, %239 : vector<16x32xf32>
    %241 = vector.broadcast %223 : vector<1x32xf32> to vector<16x32xf32>
    %242 = arith.mulf %240, %241 : vector<16x32xf32>
    %243 = vector.broadcast %224 : vector<1x32xf32> to vector<16x32xf32>
    %244 = arith.addf %242, %243 : vector<16x32xf32>
    %245 = arith.truncf %244 : vector<16x32xf32> to vector<16x32xbf16>
    %c0_69 = arith.constant 0 : index
    %c0_70 = arith.constant 0 : index
    %246 = vector.load %arg10[%c0_69, %c0_70] : memref<32x128xbf16, #tpu.memory_space<vmem>>, vector<32x128xbf16>
    %cst_71 = arith.constant dense<0.000000e+00> : vector<16x128xf32>
    %247 = tpu.matmul %245, %246, %cst_71 {dimension_numbers = #tpu.dot_dimension_numbers<[1], [0], [0], [1], [0, 0, 1, 1], [], []>} : vector<16x32xbf16>, vector<32x128xbf16>, vector<16x128xf32> -> vector<16x128xf32>
    %c0_72 = arith.constant 0 : index
    %c0_73 = arith.constant 0 : index
    %248 = vector.load %arg11[%c0_72, %c0_73] : memref<1x128xf32, #tpu.memory_space<vmem>>, vector<1x128xf32>
    %249 = vector.broadcast %248 : vector<1x128xf32> to vector<16x128xf32>
    %250 = arith.addf %247, %249 : vector<16x128xf32>
    %cst_74 = arith.constant 5.000000e-01 : f32
    %251 = vector.broadcast %cst_74 : f32 to vector<16x128xf32>
    %252 = arith.mulf %251, %250 : vector<16x128xf32>
    %cst_75 = arith.constant 0.707106769 : f32
    %253 = vector.broadcast %cst_75 : f32 to vector<16x128xf32>
    %254 = arith.mulf %250, %253 : vector<16x128xf32>
    %255 = math.erf %254 : vector<16x128xf32>
    %cst_76 = arith.constant 1.000000e+00 : f32
    %256 = vector.broadcast %cst_76 : f32 to vector<16x128xf32>
    %257 = arith.addf %256, %255 : vector<16x128xf32>
    %258 = arith.mulf %252, %257 : vector<16x128xf32>
    %259 = arith.truncf %258 : vector<16x128xf32> to vector<16x128xbf16>
    %c0_77 = arith.constant 0 : index
    %c0_78 = arith.constant 0 : index
    %260 = vector.load %arg12[%c0_77, %c0_78] : memref<128x32xbf16, #tpu.memory_space<vmem>>, vector<128x32xbf16>
    %cst_79 = arith.constant dense<0.000000e+00> : vector<16x32xf32>
    %261 = tpu.matmul %259, %260, %cst_79 {dimension_numbers = #tpu.dot_dimension_numbers<[1], [0], [0], [1], [0, 0, 1, 1], [], []>} : vector<16x128xbf16>, vector<128x32xbf16>, vector<16x32xf32> -> vector<16x32xf32>
    %c0_80 = arith.constant 0 : index
    %c0_81 = arith.constant 0 : index
    %262 = vector.load %arg13[%c0_80, %c0_81] : memref<1x32xf32, #tpu.memory_space<vmem>>, vector<1x32xf32>
    %263 = vector.broadcast %262 : vector<1x32xf32> to vector<16x32xf32>
    %264 = arith.addf %261, %263 : vector<16x32xf32>
    %265 = arith.addf %222, %264 : vector<16x32xf32>
    %c0_82 = arith.constant 0 : index
    %c0_83 = arith.constant 0 : index
    %266 = vector.load %arg14[%c0_82, %c0_83] : memref<16x32xf32, #tpu.memory_space<vmem>>, vector<16x32xf32>
    tpu.vector_store %arg14[%c0_82, %c0_83], %265 {strides = array<i32>} : memref<16x32xf32, #tpu.memory_space<vmem>>, vector<16x32xf32>,
    return
  }
  func.func @transform_0(%arg0: i32) -> (i32, i32) {
    %c0_i32 = arith.constant 0 : i32
    %c0_i32_0 = arith.constant 0 : i32
    %c0_i32_1 = arith.constant 0 : i32
    return %c0_i32, %c0_i32_0 : i32, i32
  }
  func.func @transform_1(%arg0: i32) -> (i32, i32) {
    %c0_i32 = arith.constant 0 : i32
    %c0_i32_0 = arith.constant 0 : i32
    %c0_i32_1 = arith.constant 0 : i32
    return %c0_i32, %c0_i32_0 : i32, i32
  }
  func.func @transform_2(%arg0: i32) -> (i32, i32) {
    %c0_i32 = arith.constant 0 : i32
    %c0_i32_0 = arith.constant 0 : i32
    %c0_i32_1 = arith.constant 0 : i32
    return %c0_i32, %c0_i32_0 : i32, i32
  }
  func.func @transform_3(%arg0: i32) -> (i32, i32) {
    %c0_i32 = arith.constant 0 : i32
    %c0_i32_0 = arith.constant 0 : i32
    %c0_i32_1 = arith.constant 0 : i32
    return %c0_i32, %c0_i32_0 : i32, i32
  }
  func.func @transform_4(%arg0: i32) -> (i32, i32) {
    %c0_i32 = arith.constant 0 : i32
    %c0_i32_0 = arith.constant 0 : i32
    %c0_i32_1 = arith.constant 0 : i32
    return %c0_i32, %c0_i32_0 : i32, i32
  }
  func.func @transform_5(%arg0: i32) -> (i32, i32) {
    %c0_i32 = arith.constant 0 : i32
    %c0_i32_0 = arith.constant 0 : i32
    %c0_i32_1 = arith.constant 0 : i32
    return %c0_i32, %c0_i32_0 : i32, i32
  }
  func.func @transform_6(%arg0: i32) -> (i32, i32) {
    %c0_i32 = arith.constant 0 : i32
    %c0_i32_0 = arith.constant 0 : i32
    %c0_i32_1 = arith.constant 0 : i32
    return %c0_i32, %c0_i32_0 : i32, i32
  }
  func.func @transform_7(%arg0: i32) -> (i32, i32) {
    %c0_i32 = arith.constant 0 : i32
    %c0_i32_0 = arith.constant 0 : i32
    %c0_i32_1 = arith.constant 0 : i32
    return %c0_i32, %c0_i32_0 : i32, i32
  }
  func.func @transform_8(%arg0: i32) -> (i32, i32) {
    %c0_i32 = arith.constant 0 : i32
    %c0_i32_0 = arith.constant 0 : i32
    %c0_i32_1 = arith.constant 0 : i32
    return %c0_i32, %c0_i32_0 : i32, i32
  }
  func.func @transform_9(%arg0: i32) -> (i32, i32) {
    %c0_i32 = arith.constant 0 : i32
    %c0_i32_0 = arith.constant 0 : i32
    %c0_i32_1 = arith.constant 0 : i32
    return %c0_i32, %c0_i32_0 : i32, i32
  }
  func.func @transform_10(%arg0: i32) -> (i32, i32) {
    %c0_i32 = arith.constant 0 : i32
    %c0_i32_0 = arith.constant 0 : i32
    %c0_i32_1 = arith.constant 0 : i32
    return %c0_i32, %c0_i32_0 : i32, i32
  }
  func.func @transform_11(%arg0: i32) -> (i32, i32) {
    %c0_i32 = arith.constant 0 : i32
    %c0_i32_0 = arith.constant 0 : i32
    %c0_i32_1 = arith.constant 0 : i32
    return %c0_i32, %c0_i32_0 : i32, i32
  }
  func.func @transform_12(%arg0: i32) -> (i32, i32) {
    %c0_i32 = arith.constant 0 : i32
    %c0_i32_0 = arith.constant 0 : i32
    %c0_i32_1 = arith.constant 0 : i32
    return %c0_i32, %c0_i32_0 : i32, i32
  }
  func.func @transform_13(%arg0: i32) -> (i32, i32) {
    %c0_i32 = arith.constant 0 : i32
    %c0_i32_0 = arith.constant 0 : i32
    %c0_i32_1 = arith.constant 0 : i32
    return %c0_i32, %c0_i32_0 : i32, i32
  }
}

</mosaic_0001>

<llo_original>
// kernel: tpu_custom_call.1
$region0: #{tpu_custom_call.1}
  #allocation0 [shape = 'u32[]', space=smem, size = 0x4, offset = 0x4, fixed_abs, tag = 'smem constant byte address 0x4 - core index']
  #allocation1 [shape = 'u32[144,128]{1,0:T(1,128)}', space=vmem, size = 0x12000, scoped, tag = 'internal scratch']
  %s0 = inlined_call_operand.vmem [shape: f32[16,32], index: 0, kind: input, shape index: {}]
  %s1 = inlined_call_operand.vmem [shape: f32[1,32], index: 1, kind: input, shape index: {}]
  %s2 = inlined_call_operand.vmem [shape: f32[1,32], index: 2, kind: input, shape index: {}]
  %s3 = inlined_call_operand.vmem [shape: bf16[32,96], index: 3, kind: input, shape index: {}]
  %s4 = inlined_call_operand.vmem [shape: f32[1,96], index: 4, kind: input, shape index: {}]
  %s5 = inlined_call_operand.vmem [shape: bf16[32,32], index: 5, kind: input, shape index: {}]
  %s6 = inlined_call_operand.vmem [shape: f32[1,32], index: 6, kind: input, shape index: {}]
  %s7 = inlined_call_operand.vmem [shape: f32[1,32], index: 7, kind: input, shape index: {}]
  %s8 = inlined_call_operand.vmem [shape: f32[1,32], index: 8, kind: input, shape index: {}]
  %s9 = inlined_call_operand.vmem [shape: bf16[32,128], index: 9, kind: input, shape index: {}]
  %s10 = inlined_call_operand.vmem [shape: f32[1,128], index: 10, kind: input, shape index: {}]
  %s11 = inlined_call_operand.vmem [shape: bf16[128,32], index: 11, kind: input, shape index: {}]
  %s12 = inlined_call_operand.vmem [shape: f32[1,32], index: 12, kind: input, shape index: {}]
  %s13 = inlined_call_operand.hbm [shape: f32[16,32], index: 13, kind: output, shape index: {}]
  %s14 = sld [smem:[#allocation0]]
  $region62: #{tpu_custom_call.1} parent=0
    _
  %s16 = ssub.s32 1, %s14
  %s17 = scalar_select 0, %s16, %s14
  $region1: #{tpu_custom_call.1} parent=0
    #allocation2 [shape = 'u8[8192]{0}', space=vmem, size = 0x2000, scoped, tag = 'output window, operand 0, single buffered']
    #allocation3 [shape = 's32[1]{0}', space=sflag, size = 0x4, scoped, tag = 'scoped memory for tpu_custom_call.1']
    %18 = vsyncpa [#allocation3], 0
    // Predicated region
    $region2: #{tpu_custom_call.1} parent=1 // pred_check
      _
    $region3: #{tpu_custom_call.1} parent=1 // pred_check_branch
      %20 = sbr.rel (0) target = $region5
    $region4: #{tpu_custom_call.1} parent=1 // pred_region
      _
    $region5: #{tpu_custom_call.1} parent=1 // pred_fallthru
      _
    // Predicated region
    $region6: #{tpu_custom_call.1} parent=1 // pred_check
      _
    $region7: #{tpu_custom_call.1} parent=1 // pred_check_branch
      %22 = sbr.rel (0) target = $region9
    $region8: #{tpu_custom_call.1} parent=1 // pred_region
      _
    $region9: #{tpu_custom_call.1} parent=1 // pred_fallthru
      _
    // Predicated region
    $region10: #{tpu_custom_call.1} parent=1 // pred_check
      _
    $region11: #{tpu_custom_call.1} parent=1 // pred_check_branch
      %24 = sbr.rel (0) target = $region13
    $region12: #{tpu_custom_call.1} parent=1 // pred_region
      _
    $region13: #{tpu_custom_call.1} parent=1 // pred_fallthru
      _
    // Predicated region
    $region14: #{tpu_custom_call.1} parent=1 // pred_check
      _
    $region15: #{tpu_custom_call.1} parent=1 // pred_check_branch
      %26 = sbr.rel (0) target = $region17
    $region16: #{tpu_custom_call.1} parent=1 // pred_region
      _
    $region17: #{tpu_custom_call.1} parent=1 // pred_fallthru
      _
    // Predicated region
    $region18: #{tpu_custom_call.1} parent=1 // pred_check
      _
    $region19: #{tpu_custom_call.1} parent=1 // pred_check_branch
      %28 = sbr.rel (0) target = $region21
    $region20: #{tpu_custom_call.1} parent=1 // pred_region
      _
    $region21: #{tpu_custom_call.1} parent=1 // pred_fallthru
      _
    // Predicated region
    $region22: #{tpu_custom_call.1} parent=1 // pred_check
      _
    $region23: #{tpu_custom_call.1} parent=1 // pred_check_branch
      %30 = sbr.rel (0) target = $region25
    $region24: #{tpu_custom_call.1} parent=1 // pred_region
      _
    $region25: #{tpu_custom_call.1} parent=1 // pred_fallthru
      _
    // Predicated region
    $region26: #{tpu_custom_call.1} parent=1 // pred_check
      _
    $region27: #{tpu_custom_call.1} parent=1 // pred_check_branch
      %32 = sbr.rel (0) target = $region29
    $region28: #{tpu_custom_call.1} parent=1 // pred_region
      _
    $region29: #{tpu_custom_call.1} parent=1 // pred_fallthru
      _
    // Predicated region
    $region30: #{tpu_custom_call.1} parent=1 // pred_check
      _
    $region31: #{tpu_custom_call.1} parent=1 // pred_check_branch
      %34 = sbr.rel (0) target = $region33
    $region32: #{tpu_custom_call.1} parent=1 // pred_region
      _
    $region33: #{tpu_custom_call.1} parent=1 // pred_fallthru
      _
    // Predicated region
    $region34: #{tpu_custom_call.1} parent=1 // pred_check
      _
    $region35: #{tpu_custom_call.1} parent=1 // pred_check_branch
      %36 = sbr.rel (0) target = $region37
    $region36: #{tpu_custom_call.1} parent=1 // pred_region
      _
    $region37: #{tpu_custom_call.1} parent=1 // pred_fallthru
      _
    // Predicated region
    $region38: #{tpu_custom_call.1} parent=1 // pred_check
      _
    $region39: #{tpu_custom_call.1} parent=1 // pred_check_branch
      %38 = sbr.rel (0) target = $region41
    $region40: #{tpu_custom_call.1} parent=1 // pred_region
      _
    $region41: #{tpu_custom_call.1} parent=1 // pred_fallthru
      _
    // Predicated region
    $region42: #{tpu_custom_call.1} parent=1 // pred_check
      _
    $region43: #{tpu_custom_call.1} parent=1 // pred_check_branch
      %40 = sbr.rel (0) target = $region45
    $region44: #{tpu_custom_call.1} parent=1 // pred_region
      _
    $region45: #{tpu_custom_call.1} parent=1 // pred_fallthru
      _
    // Predicated region
    $region46: #{tpu_custom_call.1} parent=1 // pred_check
      _
    $region47: #{tpu_custom_call.1} parent=1 // pred_check_branch
      %42 = sbr.rel (0) target = $region49
    $region48: #{tpu_custom_call.1} parent=1 // pred_region
      _
    $region49: #{tpu_custom_call.1} parent=1 // pred_fallthru
      _
    // Predicated region
    $region50: #{tpu_custom_call.1} parent=1 // pred_check
      _
    $region51: #{tpu_custom_call.1} parent=1 // pred_check_branch
      %44 = sbr.rel (0) target = $region53
    $region52: #{tpu_custom_call.1} parent=1 // pred_region
      _
    $region53: #{tpu_custom_call.1} parent=1 // pred_fallthru
      _
    %v46 = vld [vmem:[%s0] sm:$0xff]
    %v47 = vld [vmem:[%s0 + $0x8] sm:$0xff]
    %v48 = vld [vmem:[%s1] sm:$0x1]
    %v49 = vld [vmem:[%s2] sm:$0x1]
    %vm50 = vcmask 261120
    %v51 = vsel %vm50, %v46, 0.0
    %52 = vadd.xlane.f32.xlu0 %v51
    %v53 = vpop.xlane.xlu0 %52
    %v54 = vsel %vm50, %v47, 0.0
    %55 = vadd.xlane.f32.xlu0 %v54
    %v56 = vpop.xlane.xlu0 %55
    %v57 = vrcp.pop 32.0
    %v58 = vmul.f32 %v53, %v57
    %v59 = vmul.f32 %v56, %v57
    %v60 = vsub.f32 %v46, %v58
    %v61 = vsub.f32 %v47, %v59
    %v62 = vmul.f32 %v60, %v60
    %v63 = vmul.f32 %v61, %v61
    %v64 = vsel %vm50, %v62, 0.0
    %65 = vadd.xlane.f32.xlu0 %v64
    %v66 = vpop.xlane.xlu0 %65
    %v67 = vsel %vm50, %v63, 0.0
    %68 = vadd.xlane.f32.xlu0 %v67
    %v69 = vpop.xlane.xlu0 %68
    %v70 = vmul.f32 %v66, %v57
    %v71 = vmul.f32 %v69, %v57
    %v72 = vadd.f32 %v70, 1e-06
    %v73 = vadd.f32 %v71, 1e-06
    %v74 = vrsqrt.pop %v72
    %v75 = vrsqrt.pop %v73
    %v76 = vmul.f32 %v60, %v74
    %v77 = vmul.f32 %v61, %v75
    %v79 = vlaneseq
    %v80 = vshrl.u32 %v79, 7
    %v81 = vsub.s32 0, %v80
    %v82 = vrot.slane %v48, %v81
    %v84 = vmul.f32 %v76, %v82
    %v85 = vmul.f32 %v77, %v82
    %v87 = vlaneseq
    %v88 = vshrl.u32 %v87, 7
    %v89 = vsub.s32 0, %v88
    %v90 = vrot.slane %v49, %v89
    %v92 = vadd.f32 %v84, %v90
    %v93 = vadd.f32 %v85, %v90
    %v94 = vpack.c.bf16 %v93, %v92
    %v95 = vld [vmem:[%s3] sm:$0xf]
    %v96 = vld [vmem:[%s3 + $0x4] sm:$0xf]
    %v97 = vld [vmem:[%s3 + $0x8] sm:$0xf]
    %v98 = vld [vmem:[%s3 + $0xc] sm:$0xf]
    %v99 = vld [vmem:[%s4] sm:$0x1]
    %v101 = vlaneseq
    %v102 = vshrl.u32 %v101, 7
    %v103 = vsub.s32 0, %v102
    %v104 = vrot.slane %v99, %v103
    %v110 = vunpack.c.l.b16 %v95
    %v111 = vunpack.c.l.b16 %v96
    %v112 = vunpack.c.l.b16 %v97
    %v113 = vunpack.c.l.b16 %v98
    %v114 = vpack.c.b16 %v111, %v110
    %v115 = vpack.c.b16 %v113, %v112
    %v119 = vsel %vm50, %v94, 0
    %121 = vmatprep.subr.bf16.mxu0 0
    %122 = vmatpush1.bf16.msra.mxu0 %v114
    %123 = vmatprep.subr.bf16.mxu0 0
    %124 = vmatpush1.bf16.msra.mxu0 %v115
    %125 = vmatprep.subr.bf16.mxu0 0
    %126 = vmatpush1.bf16.msra.mxu0 0
    %127 = vmatprep.subr.bf16.mxu0 0
    %128 = vmatpush1.bf16.msra.mxu0 0
    %129 = vmatprep.subr.bf16.mxu0 0
    %130 = vmatpush1.bf16.msra.mxu0 0
    %131 = vmatprep.subr.bf16.mxu0 0
    %132 = vmatpush1.bf16.msra.mxu0 0
    %133 = vmatprep.subr.bf16.mxu0 0
    %134 = vmatpush1.bf16.msra.mxu0 0
    %135 = vmatprep.subr.bf16.mxu0 0
    %136 = vmatpush1.bf16.msra.mxu0 0
    %137 = vmatprep.subr.bf16.mxu0 0
    %138 = vmatpush1.bf16.msra.mxu0 0
    %139 = vmatprep.subr.bf16.mxu0 0
    %140 = vmatpush1.bf16.msra.mxu0 0
    %141 = vmatprep.subr.bf16.mxu0 0
    %142 = vmatpush1.bf16.msra.mxu0 0
    %143 = vmatprep.subr.bf16.mxu0 0
    %144 = vmatpush1.bf16.msra.mxu0 0
    %145 = vmatprep.subr.bf16.mxu0 0
    %146 = vmatpush1.bf16.msra.mxu0 0
    %147 = vmatprep.subr.bf16.mxu0 0
    %148 = vmatpush1.bf16.msra.mxu0 0
    %149 = vmatprep.subr.bf16.mxu0 0
    %150 = vmatpush1.bf16.msra.mxu0 0
    %151 = vmatprep.subr.bf16.mxu0 0
    %152 = vmatpush1.bf16.msra.mxu0 0
    %153 = vmatprep.mubr.bf16.mxu0 0
    %154 = vmatmul.mubr.bf16.gmra.mrb[0].mxu0 %v119
    %v155 = vpop.f32.mrb[0].mxu0
    %v156 = vadd.f32 %v104, %v155
    %v157 = vpop.f32.mrb[0].mxu0
    %v158 = vpop.f32.mrb[0].mxu0
    %v159 = vadd.f32 %v104, %v158
    %v160 = vpop.f32.mrb[0].mxu0
    %161 = vdwg.mxu0
    %v162 = vld [vmem:[%s5] sm:$0xf]
    %v163 = vld [vmem:[%s5 + $0x4] sm:$0xf]
    %v164 = vld [vmem:[%s5 + $0x8] sm:$0xf]
    %v165 = vld [vmem:[%s5 + $0xc] sm:$0xf]
    %v166 = vpack.c.bf16 %v156, %v156
    %168 = vrot.lane.b32.xlu0 %v166, 96
    %v169 = vpop.permute.xlu0 %168
    %vm170 = vcmask 64512
    %v172 = vsel %vm170, %v166, 0
    %v175 = vsel %vm170, %v169, 0
    %177 = vmatprep.subr.bf16.mxu0 0
    %178 = vmatpush1.bf16.xpose.msra.mxu0 %v175
    %179 = vmatprep.subr.bf16.mxu0 0
    %180 = vmatpush1.bf16.xpose.msra.mxu0 0
    %181 = vmatprep.subr.bf16.mxu0 0
    %182 = vmatpush1.bf16.xpose.msra.mxu0 0
    %183 = vmatprep.subr.bf16.mxu0 0
    %184 = vmatpush1.bf16.xpose.msra.mxu0 0
    %185 = vmatprep.subr.bf16.mxu0 0
    %186 = vmatpush1.bf16.xpose.msra.mxu0 0
    %187 = vmatprep.subr.bf16.mxu0 0
    %188 = vmatpush1.bf16.xpose.msra.mxu0 0
    %189 = vmatprep.subr.bf16.mxu0 0
    %190 = vmatpush1.bf16.xpose.msra.mxu0 0
    %191 = vmatprep.subr.bf16.mxu0 0
    %192 = vmatpush1.bf16.xpose.msra.mxu0 0
    %193 = vmatprep.subr.bf16.mxu0 0
    %194 = vmatpush1.bf16.xpose.msra.mxu0 0
    %195 = vmatprep.subr.bf16.mxu0 0
    %196 = vmatpush1.bf16.xpose.msra.mxu0 0
    %197 = vmatprep.subr.bf16.mxu0 0
    %198 = vmatpush1.bf16.xpose.msra.mxu0 0
    %199 = vmatprep.subr.bf16.mxu0 0
    %200 = vmatpush1.bf16.xpose.msra.mxu0 0
    %201 = vmatprep.subr.bf16.mxu0 0
    %202 = vmatpush1.bf16.xpose.msra.mxu0 0
    %203 = vmatprep.subr.bf16.mxu0 0
    %204 = vmatpush1.bf16.xpose.msra.mxu0 0
    %205 = vmatprep.subr.bf16.mxu0 0
    %206 = vmatpush1.bf16.xpose.msra.mxu0 0
    %207 = vmatprep.subr.bf16.mxu0 0
    %208 = vmatpush1.bf16.xpose.msra.mxu0 0
    %209 = vmatprep.mubr.bf16.mxu0 0
    %210 = vmatmul.mubr.bf16.gmra.mrb[0].mxu0 %v172
    %v211 = vpop.f32.mrb[0].mxu0
    %v212 = vadd.f32 0.0, %v211
    %v213 = vpop.f32.mrb[0].mxu0
    %v214 = vpop.f32.mrb[0].mxu0
    %v215 = vpop.f32.mrb[0].mxu0
    %216 = vdwg.mxu0
    %v217 = vsel %vm170, %v212, -inf
    %218 = vmax.xlane.f32.xlu0 %v217
    %v219 = vpop.xlane.xlu0 %218
    %v220 = vsub.f32 %v212, %v219
    %v221 = vmul.f32 %v220, 1.442695
    %v222 = vpow.pop %v221
    %v223 = vsel %vm170, %v222, 0.0
    %224 = vadd.xlane.f32.xlu0 %v223
    %v225 = vpop.xlane.xlu0 %224
    %v226 = vrcp.pop %v225
    %v227 = vmul.f32 %v222, %v226
    %v228 = vpack.c.bf16 %v227, %v227
    %229 = vrot.lane.b32.xlu0 %v166, 64
    %v230 = vpop.permute.xlu0 %229
    %v232 = vsel %vm170, %v228, 0
    %vm234 = vcmask 1043456
    %v236 = vsel %vm234, %v230, 0
    %238 = vmatprep.subr.bf16.mxu0 0
    %239 = vmatpush1.bf16.msra.mxu0 %v236
    %240 = vmatprep.subr.bf16.mxu0 0
    %241 = vmatpush1.bf16.msra.mxu0 0
    %242 = vmatprep.subr.bf16.mxu0 0
    %243 = vmatpush1.bf16.msra.mxu0 0
    %244 = vmatprep.subr.bf16.mxu0 0
    %245 = vmatpush1.bf16.msra.mxu0 0
    %246 = vmatprep.subr.bf16.mxu0 0
    %247 = vmatpush1.bf16.msra.mxu0 0
    %248 = vmatprep.subr.bf16.mxu0 0
    %249 = vmatpush1.bf16.msra.mxu0 0
    %250 = vmatprep.subr.bf16.mxu0 0
    %251 = vmatpush1.bf16.msra.mxu0 0
    %252 = vmatprep.subr.bf16.mxu0 0
    %253 = vmatpush1.bf16.msra.mxu0 0
    %254 = vmatprep.subr.bf16.mxu0 0
    %255 = vmatpush1.bf16.msra.mxu0 0
    %256 = vmatprep.subr.bf16.mxu0 0
    %257 = vmatpush1.bf16.msra.mxu0 0
    %258 = vmatprep.subr.bf16.mxu0 0
    %259 = vmatpush1.bf16.msra.mxu0 0
    %260 = vmatprep.subr.bf16.mxu0 0
    %261 = vmatpush1.bf16.msra.mxu0 0
    %262 = vmatprep.subr.bf16.mxu0 0
    %263 = vmatpush1.bf16.msra.mxu0 0
    %264 = vmatprep.subr.bf16.mxu0 0
    %265 = vmatpush1.bf16.msra.mxu0 0
    %266 = vmatprep.subr.bf16.mxu0 0
    %267 = vmatpush1.bf16.msra.mxu0 0
    %268 = vmatprep.subr.bf16.mxu0 0
    %269 = vmatpush1.bf16.msra.mxu0 0
    %270 = vmatprep.mubr.bf16.mxu0 0
    %271 = vmatmul.mubr.bf16.gmra.mrb[0].mxu0 %v232
    %v272 = vpop.f32.mrb[0].mxu0
    %v273 = vadd.f32 0.0, %v272
    %v274 = vpop.f32.mrb[0].mxu0
    %v275 = vpop.f32.mrb[0].mxu0
    %v276 = vpop.f32.mrb[0].mxu0
    %277 = vdwg.mxu0
    %v278 = vpack.c.bf16 %v273, %v273
    %279 = vrot.lane.b32.xlu0 %v166, 120
    %v280 = vpop.permute.xlu0 %279
    %281 = vrot.lane.b32.xlu0 %v166, 88
    %v282 = vpop.permute.xlu0 %281
    %v284 = vsel %vm170, %v280, 0
    %v287 = vsel %vm170, %v282, 0
    %289 = vmatprep.subr.bf16.mxu0 0
    %290 = vmatpush1.bf16.xpose.msra.mxu0 %v287
    %291 = vmatprep.subr.bf16.mxu0 0
    %292 = vmatpush1.bf16.xpose.msra.mxu0 0
    %293 = vmatprep.subr.bf16.mxu0 0
    %294 = vmatpush1.bf16.xpose.msra.mxu0 0
    %295 = vmatprep.subr.bf16.mxu0 0
    %296 = vmatpush1.bf16.xpose.msra.mxu0 0
    %297 = vmatprep.subr.bf16.mxu0 0
    %298 = vmatpush1.bf16.xpose.msra.mxu0 0
    %299 = vmatprep.subr.bf16.mxu0 0
    %300 = vmatpush1.bf16.xpose.msra.mxu0 0
    %301 = vmatprep.subr.bf16.mxu0 0
    %302 = vmatpush1.bf16.xpose.msra.mxu0 0
    %303 = vmatprep.subr.bf16.mxu0 0
    %304 = vmatpush1.bf16.xpose.msra.mxu0 0
    %305 = vmatprep.subr.bf16.mxu0 0
    %306 = vmatpush1.bf16.xpose.msra.mxu0 0
    %307 = vmatprep.subr.bf16.mxu0 0
    %308 = vmatpush1.bf16.xpose.msra.mxu0 0
    %309 = vmatprep.subr.bf16.mxu0 0
    %310 = vmatpush1.bf16.xpose.msra.mxu0 0
    %311 = vmatprep.subr.bf16.mxu0 0
    %312 = vmatpush1.bf16.xpose.msra.mxu0 0
    %313 = vmatprep.subr.bf16.mxu0 0
    %314 = vmatpush1.bf16.xpose.msra.mxu0 0
    %315 = vmatprep.subr.bf16.mxu0 0
    %316 = vmatpush1.bf16.xpose.msra.mxu0 0
    %317 = vmatprep.subr.bf16.mxu0 0
    %318 = vmatpush1.bf16.xpose.msra.mxu0 0
    %319 = vmatprep.subr.bf16.mxu0 0
    %320 = vmatpush1.bf16.xpose.msra.mxu0 0
    %321 = vmatprep.mubr.bf16.mxu0 0
    %322 = vmatmul.mubr.bf16.gmra.mrb[0].mxu0 %v284
    %v323 = vpop.f32.mrb[0].mxu0
    %v324 = vadd.f32 0.0, %v323
    %v325 = vpop.f32.mrb[0].mxu0
    %v326 = vpop.f32.mrb[0].mxu0
    %v327 = vpop.f32.mrb[0].mxu0
    %328 = vdwg.mxu0
    %v329 = vsel %vm170, %v324, -inf
    %330 = vmax.xlane.f32.xlu0 %v329
    %v331 = vpop.xlane.xlu0 %330
    %v332 = vsub.f32 %v324, %v331
    %v333 = vmul.f32 %v332, 1.442695
    %v334 = vpow.pop %v333
    %v335 = vsel %vm170, %v334, 0.0
    %336 = vadd.xlane.f32.xlu0 %v335
    %v337 = vpop.xlane.xlu0 %336
    %v338 = vrcp.pop %v337
    %v339 = vmul.f32 %v334, %v338
    %v340 = vpack.c.bf16 %v339, %v339
    %341 = vrot.lane.b32.xlu0 %v166, 56
    %v342 = vpop.permute.xlu0 %341
    %v344 = vsel %vm170, %v340, 0
    %v347 = vsel %vm234, %v342, 0
    %349 = vmatprep.subr.bf16.mxu0 0
    %350 = vmatpush1.bf16.msra.mxu0 %v347
    %351 = vmatprep.subr.bf16.mxu0 0
    %352 = vmatpush1.bf16.msra.mxu0 0
    %353 = vmatprep.subr.bf16.mxu0 0
    %354 = vmatpush1.bf16.msra.mxu0 0
    %355 = vmatprep.subr.bf16.mxu0 0
    %356 = vmatpush1.bf16.msra.mxu0 0
    %357 = vmatprep.subr.bf16.mxu0 0
    %358 = vmatpush1.bf16.msra.mxu0 0
    %359 = vmatprep.subr.bf16.mxu0 0
    %360 = vmatpush1.bf16.msra.mxu0 0
    %361 = vmatprep.subr.bf16.mxu0 0
    %362 = vmatpush1.bf16.msra.mxu0 0
    %363 = vmatprep.subr.bf16.mxu0 0
    %364 = vmatpush1.bf16.msra.mxu0 0
    %365 = vmatprep.subr.bf16.mxu0 0
    %366 = vmatpush1.bf16.msra.mxu0 0
    %367 = vmatprep.subr.bf16.mxu0 0
    %368 = vmatpush1.bf16.msra.mxu0 0
    %369 = vmatprep.subr.bf16.mxu0 0
    %370 = vmatpush1.bf16.msra.mxu0 0
    %371 = vmatprep.subr.bf16.mxu0 0
    %372 = vmatpush1.bf16.msra.mxu0 0
    %373 = vmatprep.subr.bf16.mxu0 0
    %374 = vmatpush1.bf16.msra.mxu0 0
    %375 = vmatprep.subr.bf16.mxu0 0
    %376 = vmatpush1.bf16.msra.mxu0 0
    %377 = vmatprep.subr.bf16.mxu0 0
    %378 = vmatpush1.bf16.msra.mxu0 0
    %379 = vmatprep.subr.bf16.mxu0 0
    %380 = vmatpush1.bf16.msra.mxu0 0
    %381 = vmatprep.mubr.bf16.mxu0 0
    %382 = vmatmul.mubr.bf16.gmra.mrb[0].mxu0 %v344
    %v383 = vpop.f32.mrb[0].mxu0
    %v384 = vadd.f32 0.0, %v383
    %v385 = vpop.f32.mrb[0].mxu0
    %v386 = vpop.f32.mrb[0].mxu0
    %v387 = vpop.f32.mrb[0].mxu0
    %388 = vdwg.mxu0
    %v389 = vpack.c.bf16 %v384, %v384
    %v391 = vsel %vm170, %v389, 0
    %v394 = vsel %vm234, %v163, 0
    %396 = vmatprep.subr.bf16.mxu0 0
    %397 = vmatpush1.bf16.msra.mxu0 %v394
    %398 = vmatprep.subr.bf16.mxu0 0
    %399 = vmatpush1.bf16.msra.mxu0 0
    %400 = vmatprep.subr.bf16.mxu0 0
    %401 = vmatpush1.bf16.msra.mxu0 0
    %402 = vmatprep.subr.bf16.mxu0 0
    %403 = vmatpush1.bf16.msra.mxu0 0
    %404 = vmatprep.subr.bf16.mxu0 0
    %405 = vmatpush1.bf16.msra.mxu0 0
    %406 = vmatprep.subr.bf16.mxu0 0
    %407 = vmatpush1.bf16.msra.mxu0 0
    %408 = vmatprep.subr.bf16.mxu0 0
    %409 = vmatpush1.bf16.msra.mxu0 0
    %410 = vmatprep.subr.bf16.mxu0 0
    %411 = vmatpush1.bf16.msra.mxu0 0
    %412 = vmatprep.subr.bf16.mxu0 0
    %413 = vmatpush1.bf16.msra.mxu0 0
    %414 = vmatprep.subr.bf16.mxu0 0
    %415 = vmatpush1.bf16.msra.mxu0 0
    %416 = vmatprep.subr.bf16.mxu0 0
    %417 = vmatpush1.bf16.msra.mxu0 0
    %418 = vmatprep.subr.bf16.mxu0 0
    %419 = vmatpush1.bf16.msra.mxu0 0
    %420 = vmatprep.subr.bf16.mxu0 0
    %421 = vmatpush1.bf16.msra.mxu0 0
    %422 = vmatprep.subr.bf16.mxu0 0
    %423 = vmatpush1.bf16.msra.mxu0 0
    %424 = vmatprep.subr.bf16.mxu0 0
    %425 = vmatpush1.bf16.msra.mxu0 0
    %426 = vmatprep.subr.bf16.mxu0 0
    %427 = vmatpush1.bf16.msra.mxu0 0
    %428 = vmatprep.mubr.bf16.mxu0 0
    %429 = vmatmul.mubr.bf16.gmra.mrb[0].mxu0 %v391
    %v430 = vpop.f32.mrb[0].mxu0
    %v431 = vadd.f32 0.0, %v430
    %v432 = vpop.f32.mrb[0].mxu0
    %v433 = vpop.f32.mrb[0].mxu0
    %v434 = vpop.f32.mrb[0].mxu0
    %435 = vdwg.mxu0
    %v437 = vsel %vm170, %v278, 0
    %v440 = vsel %vm234, %v162, 0
    %442 = vmatprep.subr.bf16.mxu0 0
    %443 = vmatpush1.bf16.msra.mxu0 %v440
    %444 = vmatprep.subr.bf16.mxu0 0
    %445 = vmatpush1.bf16.msra.mxu0 0
    %446 = vmatprep.subr.bf16.mxu0 0
    %447 = vmatpush1.bf16.msra.mxu0 0
    %448 = vmatprep.subr.bf16.mxu0 0
    %449 = vmatpush1.bf16.msra.mxu0 0
    %450 = vmatprep.subr.bf16.mxu0 0
    %451 = vmatpush1.bf16.msra.mxu0 0
    %452 = vmatprep.subr.bf16.mxu0 0
    %453 = vmatpush1.bf16.msra.mxu0 0
    %454 = vmatprep.subr.bf16.mxu0 0
    %455 = vmatpush1.bf16.msra.mxu0 0
    %456 = vmatprep.subr.bf16.mxu0 0
    %457 = vmatpush1.bf16.msra.mxu0 0
    %458 = vmatprep.subr.bf16.mxu0 0
    %459 = vmatpush1.bf16.msra.mxu0 0
    %460 = vmatprep.subr.bf16.mxu0 0
    %461 = vmatpush1.bf16.msra.mxu0 0
    %462 = vmatprep.subr.bf16.mxu0 0
    %463 = vmatpush1.bf16.msra.mxu0 0
    %464 = vmatprep.subr.bf16.mxu0 0
    %465 = vmatpush1.bf16.msra.mxu0 0
    %466 = vmatprep.subr.bf16.mxu0 0
    %467 = vmatpush1.bf16.msra.mxu0 0
    %468 = vmatprep.subr.bf16.mxu0 0
    %469 = vmatpush1.bf16.msra.mxu0 0
    %470 = vmatprep.subr.bf16.mxu0 0
    %471 = vmatpush1.bf16.msra.mxu0 0
    %472 = vmatprep.subr.bf16.mxu0 0
    %473 = vmatpush1.bf16.msra.mxu0 0
    %474 = vmatprep.mubr.bf16.mxu0 0
    %475 = vmatmul.mubr.bf16.gmra.mrb[0].mxu0 %v437
    %v476 = vpop.f32.mrb[0].mxu0
    %v477 = vadd.f32 %v431, %v476
    %v478 = vpop.f32.mrb[0].mxu0
    %v479 = vpop.f32.mrb[0].mxu0
    %v480 = vpop.f32.mrb[0].mxu0
    %481 = vdwg.mxu0
    %482 = vrot.lane.b32.xlu0 %v166, 112
    %v483 = vpop.permute.xlu0 %482
    %484 = vrot.lane.b32.xlu0 %v166, 80
    %v485 = vpop.permute.xlu0 %484
    %v487 = vsel %vm170, %v483, 0
    %v490 = vsel %vm170, %v485, 0
    %492 = vmatprep.subr.bf16.mxu0 0
    %493 = vmatpush1.bf16.xpose.msra.mxu0 %v490
    %494 = vmatprep.subr.bf16.mxu0 0
    %495 = vmatpush1.bf16.xpose.msra.mxu0 0
    %496 = vmatprep.subr.bf16.mxu0 0
    %497 = vmatpush1.bf16.xpose.msra.mxu0 0
    %498 = vmatprep.subr.bf16.mxu0 0
    %499 = vmatpush1.bf16.xpose.msra.mxu0 0
    %500 = vmatprep.subr.bf16.mxu0 0
    %501 = vmatpush1.bf16.xpose.msra.mxu0 0
    %502 = vmatprep.subr.bf16.mxu0 0
    %503 = vmatpush1.bf16.xpose.msra.mxu0 0
    %504 = vmatprep.subr.bf16.mxu0 0
    %505 = vmatpush1.bf16.xpose.msra.mxu0 0
    %506 = vmatprep.subr.bf16.mxu0 0
    %507 = vmatpush1.bf16.xpose.msra.mxu0 0
    %508 = vmatprep.subr.bf16.mxu0 0
    %509 = vmatpush1.bf16.xpose.msra.mxu0 0
    %510 = vmatprep.subr.bf16.mxu0 0
    %511 = vmatpush1.bf16.xpose.msra.mxu0 0
    %512 = vmatprep.subr.bf16.mxu0 0
    %513 = vmatpush1.bf16.xpose.msra.mxu0 0
    %514 = vmatprep.subr.bf16.mxu0 0
    %515 = vmatpush1.bf16.xpose.msra.mxu0 0
    %516 = vmatprep.subr.bf16.mxu0 0
    %517 = vmatpush1.bf16.xpose.msra.mxu0 0
    %518 = vmatprep.subr.bf16.mxu0 0
    %519 = vmatpush1.bf16.xpose.msra.mxu0 0
    %520 = vmatprep.subr.bf16.mxu0 0
    %521 = vmatpush1.bf16.xpose.msra.mxu0 0
    %522 = vmatprep.subr.bf16.mxu0 0
    %523 = vmatpush1.bf16.xpose.msra.mxu0 0
    %524 = vmatprep.mubr.bf16.mxu0 0
    %525 = vmatmul.mubr.bf16.gmra.mrb[0].mxu0 %v487
    %v526 = vpop.f32.mrb[0].mxu0
    %v527 = vadd.f32 0.0, %v526
    %v528 = vpop.f32.mrb[0].mxu0
    %v529 = vpop.f32.mrb[0].mxu0
    %v530 = vpop.f32.mrb[0].mxu0
    %531 = vdwg.mxu0
    %v532 = vsel %vm170, %v527, -inf
    %533 = vmax.xlane.f32.xlu0 %v532
    %v534 = vpop.xlane.xlu0 %533
    %v535 = vsub.f32 %v527, %v534
    %v536 = vmul.f32 %v535, 1.442695
    %v537 = vpow.pop %v536
    %v538 = vsel %vm170, %v537, 0.0
    %539 = vadd.xlane.f32.xlu0 %v538
    %v540 = vpop.xlane.xlu0 %539
    %v541 = vrcp.pop %v540
    %v542 = vmul.f32 %v537, %v541
    %v543 = vpack.c.bf16 %v542, %v542
    %544 = vrot.lane.b32.xlu0 %v166, 48
    %v545 = vpop.permute.xlu0 %544
    %v547 = vsel %vm170, %v543, 0
    %v550 = vsel %vm234, %v545, 0
    %552 = vmatprep.subr.bf16.mxu0 0
    %553 = vmatpush1.bf16.msra.mxu0 %v550
    %554 = vmatprep.subr.bf16.mxu0 0
    %555 = vmatpush1.bf16.msra.mxu0 0
    %556 = vmatprep.subr.bf16.mxu0 0
    %557 = vmatpush1.bf16.msra.mxu0 0
    %558 = vmatprep.subr.bf16.mxu0 0
    %559 = vmatpush1.bf16.msra.mxu0 0
    %560 = vmatprep.subr.bf16.mxu0 0
    %561 = vmatpush1.bf16.msra.mxu0 0
    %562 = vmatprep.subr.bf16.mxu0 0
    %563 = vmatpush1.bf16.msra.mxu0 0
    %564 = vmatprep.subr.bf16.mxu0 0
    %565 = vmatpush1.bf16.msra.mxu0 0
    %566 = vmatprep.subr.bf16.mxu0 0
    %567 = vmatpush1.bf16.msra.mxu0 0
    %568 = vmatprep.subr.bf16.mxu0 0
    %569 = vmatpush1.bf16.msra.mxu0 0
    %570 = vmatprep.subr.bf16.mxu0 0
    %571 = vmatpush1.bf16.msra.mxu0 0
    %572 = vmatprep.subr.bf16.mxu0 0
    %573 = vmatpush1.bf16.msra.mxu0 0
    %574 = vmatprep.subr.bf16.mxu0 0
    %575 = vmatpush1.bf16.msra.mxu0 0
    %576 = vmatprep.subr.bf16.mxu0 0
    %577 = vmatpush1.bf16.msra.mxu0 0
    %578 = vmatprep.subr.bf16.mxu0 0
    %579 = vmatpush1.bf16.msra.mxu0 0
    %580 = vmatprep.subr.bf16.mxu0 0
    %581 = vmatpush1.bf16.msra.mxu0 0
    %582 = vmatprep.subr.bf16.mxu0 0
    %583 = vmatpush1.bf16.msra.mxu0 0
    %584 = vmatprep.mubr.bf16.mxu0 0
    %585 = vmatmul.mubr.bf16.gmra.mrb[0].mxu0 %v547
    %v586 = vpop.f32.mrb[0].mxu0
    %v587 = vadd.f32 0.0, %v586
    %v588 = vpop.f32.mrb[0].mxu0
    %v589 = vpop.f32.mrb[0].mxu0
    %v590 = vpop.f32.mrb[0].mxu0
    %591 = vdwg.mxu0
    %v592 = vpack.c.bf16 %v587, %v587
    %v594 = vsel %vm170, %v592, 0
    %v597 = vsel %vm234, %v164, 0
    %599 = vmatprep.subr.bf16.mxu0 0
    %600 = vmatpush1.bf16.msra.mxu0 %v597
    %601 = vmatprep.subr.bf16.mxu0 0
    %602 = vmatpush1.bf16.msra.mxu0 0
    %603 = vmatprep.subr.bf16.mxu0 0
    %604 = vmatpush1.bf16.msra.mxu0 0
    %605 = vmatprep.subr.bf16.mxu0 0
    %606 = vmatpush1.bf16.msra.mxu0 0
    %607 = vmatprep.subr.bf16.mxu0 0
    %608 = vmatpush1.bf16.msra.mxu0 0
    %609 = vmatprep.subr.bf16.mxu0 0
    %610 = vmatpush1.bf16.msra.mxu0 0
    %611 = vmatprep.subr.bf16.mxu0 0
    %612 = vmatpush1.bf16.msra.mxu0 0
    %613 = vmatprep.subr.bf16.mxu0 0
    %614 = vmatpush1.bf16.msra.mxu0 0
    %615 = vmatprep.subr.bf16.mxu0 0
    %616 = vmatpush1.bf16.msra.mxu0 0
    %617 = vmatprep.subr.bf16.mxu0 0
    %618 = vmatpush1.bf16.msra.mxu0 0
    %619 = vmatprep.subr.bf16.mxu0 0
    %620 = vmatpush1.bf16.msra.mxu0 0
    %621 = vmatprep.subr.bf16.mxu0 0
    %622 = vmatpush1.bf16.msra.mxu0 0
    %623 = vmatprep.subr.bf16.mxu0 0
    %624 = vmatpush1.bf16.msra.mxu0 0
    %625 = vmatprep.subr.bf16.mxu0 0
    %626 = vmatpush1.bf16.msra.mxu0 0
    %627 = vmatprep.subr.bf16.mxu0 0
    %628 = vmatpush1.bf16.msra.mxu0 0
    %629 = vmatprep.subr.bf16.mxu0 0
    %630 = vmatpush1.bf16.msra.mxu0 0
    %631 = vmatprep.mubr.bf16.mxu0 0
    %632 = vmatmul.mubr.bf16.gmra.mrb[0].mxu0 %v594
    %v633 = vpop.f32.mrb[0].mxu0
    %v634 = vadd.f32 0.0, %v633
    %v635 = vpop.f32.mrb[0].mxu0
    %v636 = vpop.f32.mrb[0].mxu0
    %v637 = vpop.f32.mrb[0].mxu0
    %638 = vdwg.mxu0
    %v639 = vadd.f32 %v477, %v634
    %640 = vrot.lane.b32.xlu0 %v166, 104
    %v641 = vpop.permute.xlu0 %640
    %642 = vrot.lane.b32.xlu0 %v166, 72
    %v643 = vpop.permute.xlu0 %642
    %v645 = vsel %vm170, %v641, 0
    %v648 = vsel %vm170, %v643, 0
    %650 = vmatprep.subr.bf16.mxu0 0
    %651 = vmatpush1.bf16.xpose.msra.mxu0 %v648
    %652 = vmatprep.subr.bf16.mxu0 0
    %653 = vmatpush1.bf16.xpose.msra.mxu0 0
    %654 = vmatprep.subr.bf16.mxu0 0
    %655 = vmatpush1.bf16.xpose.msra.mxu0 0
    %656 = vmatprep.subr.bf16.mxu0 0
    %657 = vmatpush1.bf16.xpose.msra.mxu0 0
    %658 = vmatprep.subr.bf16.mxu0 0
    %659 = vmatpush1.bf16.xpose.msra.mxu0 0
    %660 = vmatprep.subr.bf16.mxu0 0
    %661 = vmatpush1.bf16.xpose.msra.mxu0 0
    %662 = vmatprep.subr.bf16.mxu0 0
    %663 = vmatpush1.bf16.xpose.msra.mxu0 0
    %664 = vmatprep.subr.bf16.mxu0 0
    %665 = vmatpush1.bf16.xpose.msra.mxu0 0
    %666 = vmatprep.subr.bf16.mxu0 0
    %667 = vmatpush1.bf16.xpose.msra.mxu0 0
    %668 = vmatprep.subr.bf16.mxu0 0
    %669 = vmatpush1.bf16.xpose.msra.mxu0 0
    %670 = vmatprep.subr.bf16.mxu0 0
    %671 = vmatpush1.bf16.xpose.msra.mxu0 0
    %672 = vmatprep.subr.bf16.mxu0 0
    %673 = vmatpush1.bf16.xpose.msra.mxu0 0
    %674 = vmatprep.subr.bf16.mxu0 0
    %675 = vmatpush1.bf16.xpose.msra.mxu0 0
    %676 = vmatprep.subr.bf16.mxu0 0
    %677 = vmatpush1.bf16.xpose.msra.mxu0 0
    %678 = vmatprep.subr.bf16.mxu0 0
    %679 = vmatpush1.bf16.xpose.msra.mxu0 0
    %680 = vmatprep.subr.bf16.mxu0 0
    %681 = vmatpush1.bf16.xpose.msra.mxu0 0
    %682 = vmatprep.mubr.bf16.mxu0 0
    %683 = vmatmul.mubr.bf16.gmra.mrb[0].mxu0 %v645
    %v684 = vpop.f32.mrb[0].mxu0
    %v685 = vadd.f32 0.0, %v684
    %v686 = vpop.f32.mrb[0].mxu0
    %v687 = vpop.f32.mrb[0].mxu0
    %v688 = vpop.f32.mrb[0].mxu0
    %689 = vdwg.mxu0
    %v690 = vsel %vm170, %v685, -inf
    %691 = vmax.xlane.f32.xlu0 %v690
    %v692 = vpop.xlane.xlu0 %691
    %v693 = vsub.f32 %v685, %v692
    %v694 = vmul.f32 %v693, 1.442695
    %v695 = vpow.pop %v694
    %v696 = vsel %vm170, %v695, 0.0
    %697 = vadd.xlane.f32.xlu0 %v696
    %v698 = vpop.xlane.xlu0 %697
    %v699 = vrcp.pop %v698
    %v700 = vmul.f32 %v695, %v699
    %v701 = vpack.c.bf16 %v700, %v700
    %702 = vrot.lane.b32.xlu0 %v166, 40
    %v703 = vpop.permute.xlu0 %702
    %v705 = vsel %vm170, %v701, 0
    %v708 = vsel %vm234, %v703, 0
    %710 = vmatprep.subr.bf16.mxu0 0
    %711 = vmatpush1.bf16.msra.mxu0 %v708
    %712 = vmatprep.subr.bf16.mxu0 0
    %713 = vmatpush1.bf16.msra.mxu0 0
    %714 = vmatprep.subr.bf16.mxu0 0
    %715 = vmatpush1.bf16.msra.mxu0 0
    %716 = vmatprep.subr.bf16.mxu0 0
    %717 = vmatpush1.bf16.msra.mxu0 0
    %718 = vmatprep.subr.bf16.mxu0 0
    %719 = vmatpush1.bf16.msra.mxu0 0
    %720 = vmatprep.subr.bf16.mxu0 0
    %721 = vmatpush1.bf16.msra.mxu0 0
    %722 = vmatprep.subr.bf16.mxu0 0
    %723 = vmatpush1.bf16.msra.mxu0 0
    %724 = vmatprep.subr.bf16.mxu0 0
    %725 = vmatpush1.bf16.msra.mxu0 0
    %726 = vmatprep.subr.bf16.mxu0 0
    %727 = vmatpush1.bf16.msra.mxu0 0
    %728 = vmatprep.subr.bf16.mxu0 0
    %729 = vmatpush1.bf16.msra.mxu0 0
    %730 = vmatprep.subr.bf16.mxu0 0
    %731 = vmatpush1.bf16.msra.mxu0 0
    %732 = vmatprep.subr.bf16.mxu0 0
    %733 = vmatpush1.bf16.msra.mxu0 0
    %734 = vmatprep.subr.bf16.mxu0 0
    %735 = vmatpush1.bf16.msra.mxu0 0
    %736 = vmatprep.subr.bf16.mxu0 0
    %737 = vmatpush1.bf16.msra.mxu0 0
    %738 = vmatprep.subr.bf16.mxu0 0
    %739 = vmatpush1.bf16.msra.mxu0 0
    %740 = vmatprep.subr.bf16.mxu0 0
    %741 = vmatpush1.bf16.msra.mxu0 0
    %742 = vmatprep.mubr.bf16.mxu0 0
    %743 = vmatmul.mubr.bf16.gmra.mrb[0].mxu0 %v705
    %v744 = vpop.f32.mrb[0].mxu0
    %v745 = vadd.f32 0.0, %v744
    %v746 = vpop.f32.mrb[0].mxu0
    %v747 = vpop.f32.mrb[0].mxu0
    %v748 = vpop.f32.mrb[0].mxu0
    %749 = vdwg.mxu0
    %v750 = vpack.c.bf16 %v745, %v745
    %v752 = vsel %vm170, %v750, 0
    %v755 = vsel %vm234, %v165, 0
    %757 = vmatprep.subr.bf16.mxu0 0
    %758 = vmatpush1.bf16.msra.mxu0 %v755
    %759 = vmatprep.subr.bf16.mxu0 0
    %760 = vmatpush1.bf16.msra.mxu0 0
    %761 = vmatprep.subr.bf16.mxu0 0
    %762 = vmatpush1.bf16.msra.mxu0 0
    %763 = vmatprep.subr.bf16.mxu0 0
    %764 = vmatpush1.bf16.msra.mxu0 0
    %765 = vmatprep.subr.bf16.mxu0 0
    %766 = vmatpush1.bf16.msra.mxu0 0
    %767 = vmatprep.subr.bf16.mxu0 0
    %768 = vmatpush1.bf16.msra.mxu0 0
    %769 = vmatprep.subr.bf16.mxu0 0
    %770 = vmatpush1.bf16.msra.mxu0 0
    %771 = vmatprep.subr.bf16.mxu0 0
    %772 = vmatpush1.bf16.msra.mxu0 0
    %773 = vmatprep.subr.bf16.mxu0 0
    %774 = vmatpush1.bf16.msra.mxu0 0
    %775 = vmatprep.subr.bf16.mxu0 0
    %776 = vmatpush1.bf16.msra.mxu0 0
    %777 = vmatprep.subr.bf16.mxu0 0
    %778 = vmatpush1.bf16.msra.mxu0 0
    %779 = vmatprep.subr.bf16.mxu0 0
    %780 = vmatpush1.bf16.msra.mxu0 0
    %781 = vmatprep.subr.bf16.mxu0 0
    %782 = vmatpush1.bf16.msra.mxu0 0
    %783 = vmatprep.subr.bf16.mxu0 0
    %784 = vmatpush1.bf16.msra.mxu0 0
    %785 = vmatprep.subr.bf16.mxu0 0
    %786 = vmatpush1.bf16.msra.mxu0 0
    %787 = vmatprep.subr.bf16.mxu0 0
    %788 = vmatpush1.bf16.msra.mxu0 0
    %789 = vmatprep.mubr.bf16.mxu0 0
    %790 = vmatmul.mubr.bf16.gmra.mrb[0].mxu0 %v752
    %v791 = vpop.f32.mrb[0].mxu0
    %v792 = vadd.f32 0.0, %v791
    %v793 = vpop.f32.mrb[0].mxu0
    %v794 = vpop.f32.mrb[0].mxu0
    %v795 = vpop.f32.mrb[0].mxu0
    %796 = vdwg.mxu0
    %v797 = vadd.f32 %v639, %v792
    %v798 = vpack.c.bf16 %v159, %v159
    %800 = vrot.lane.b32.xlu0 %v798, 96
    %v801 = vpop.permute.xlu0 %800
    %v803 = vsel %vm170, %v798, 0
    %v806 = vsel %vm170, %v801, 0
    %808 = vmatprep.subr.bf16.mxu0 0
    %809 = vmatpush1.bf16.xpose.msra.mxu0 %v806
    %810 = vmatprep.subr.bf16.mxu0 0
    %811 = vmatpush1.bf16.xpose.msra.mxu0 0
    %812 = vmatprep.subr.bf16.mxu0 0
    %813 = vmatpush1.bf16.xpose.msra.mxu0 0
    %814 = vmatprep.subr.bf16.mxu0 0
    %815 = vmatpush1.bf16.xpose.msra.mxu0 0
    %816 = vmatprep.subr.bf16.mxu0 0
    %817 = vmatpush1.bf16.xpose.msra.mxu0 0
    %818 = vmatprep.subr.bf16.mxu0 0
    %819 = vmatpush1.bf16.xpose.msra.mxu0 0
    %820 = vmatprep.subr.bf16.mxu0 0
    %821 = vmatpush1.bf16.xpose.msra.mxu0 0
    %822 = vmatprep.subr.bf16.mxu0 0
    %823 = vmatpush1.bf16.xpose.msra.mxu0 0
    %824 = vmatprep.subr.bf16.mxu0 0
    %825 = vmatpush1.bf16.xpose.msra.mxu0 0
    %826 = vmatprep.subr.bf16.mxu0 0
    %827 = vmatpush1.bf16.xpose.msra.mxu0 0
    %828 = vmatprep.subr.bf16.mxu0 0
    %829 = vmatpush1.bf16.xpose.msra.mxu0 0
    %830 = vmatprep.subr.bf16.mxu0 0
    %831 = vmatpush1.bf16.xpose.msra.mxu0 0
    %832 = vmatprep.subr.bf16.mxu0 0
    %833 = vmatpush1.bf16.xpose.msra.mxu0 0
    %834 = vmatprep.subr.bf16.mxu0 0
    %835 = vmatpush1.bf16.xpose.msra.mxu0 0
    %836 = vmatprep.subr.bf16.mxu0 0
    %837 = vmatpush1.bf16.xpose.msra.mxu0 0
    %838 = vmatprep.subr.bf16.mxu0 0
    %839 = vmatpush1.bf16.xpose.msra.mxu0 0
    %840 = vmatprep.mubr.bf16.mxu0 0
    %841 = vmatmul.mubr.bf16.gmra.mrb[0].mxu0 %v803
    %v842 = vpop.f32.mrb[0].mxu0
    %v843 = vadd.f32 0.0, %v842
    %v844 = vpop.f32.mrb[0].mxu0
    %v845 = vpop.f32.mrb[0].mxu0
    %v846 = vpop.f32.mrb[0].mxu0
    %847 = vdwg.mxu0
    %v848 = vsel %vm170, %v843, -inf
    %849 = vmax.xlane.f32.xlu0 %v848
    %v850 = vpop.xlane.xlu0 %849
    %v851 = vsub.f32 %v843, %v850
    %v852 = vmul.f32 %v851, 1.442695
    %v853 = vpow.pop %v852
    %v854 = vsel %vm170, %v853, 0.0
    %855 = vadd.xlane.f32.xlu0 %v854
    %v856 = vpop.xlane.xlu0 %855
    %v857 = vrcp.pop %v856
    %v858 = vmul.f32 %v853, %v857
    %v859 = vpack.c.bf16 %v858, %v858
    %860 = vrot.lane.b32.xlu0 %v798, 64
    %v861 = vpop.permute.xlu0 %860
    %v863 = vsel %vm170, %v859, 0
    %v866 = vsel %vm234, %v861, 0
    %868 = vmatprep.subr.bf16.mxu0 0
    %869 = vmatpush1.bf16.msra.mxu0 %v866
    %870 = vmatprep.subr.bf16.mxu0 0
    %871 = vmatpush1.bf16.msra.mxu0 0
    %872 = vmatprep.subr.bf16.mxu0 0
    %873 = vmatpush1.bf16.msra.mxu0 0
    %874 = vmatprep.subr.bf16.mxu0 0
    %875 = vmatpush1.bf16.msra.mxu0 0
    %876 = vmatprep.subr.bf16.mxu0 0
    %877 = vmatpush1.bf16.msra.mxu0 0
    %878 = vmatprep.subr.bf16.mxu0 0
    %879 = vmatpush1.bf16.msra.mxu0 0
    %880 = vmatprep.subr.bf16.mxu0 0
    %881 = vmatpush1.bf16.msra.mxu0 0
    %882 = vmatprep.subr.bf16.mxu0 0
    %883 = vmatpush1.bf16.msra.mxu0 0
    %884 = vmatprep.subr.bf16.mxu0 0
    %885 = vmatpush1.bf16.msra.mxu0 0
    %886 = vmatprep.subr.bf16.mxu0 0
    %887 = vmatpush1.bf16.msra.mxu0 0
    %888 = vmatprep.subr.bf16.mxu0 0
    %889 = vmatpush1.bf16.msra.mxu0 0
    %890 = vmatprep.subr.bf16.mxu0 0
    %891 = vmatpush1.bf16.msra.mxu0 0
    %892 = vmatprep.subr.bf16.mxu0 0
    %893 = vmatpush1.bf16.msra.mxu0 0
    %894 = vmatprep.subr.bf16.mxu0 0
    %895 = vmatpush1.bf16.msra.mxu0 0
    %896 = vmatprep.subr.bf16.mxu0 0
    %897 = vmatpush1.bf16.msra.mxu0 0
    %898 = vmatprep.subr.bf16.mxu0 0
    %899 = vmatpush1.bf16.msra.mxu0 0
    %900 = vmatprep.mubr.bf16.mxu0 0
    %901 = vmatmul.mubr.bf16.gmra.mrb[0].mxu0 %v863
    %v902 = vpop.f32.mrb[0].mxu0
    %v903 = vadd.f32 0.0, %v902
    %v904 = vpop.f32.mrb[0].mxu0
    %v905 = vpop.f32.mrb[0].mxu0
    %v906 = vpop.f32.mrb[0].mxu0
    %907 = vdwg.mxu0
    %v908 = vpack.c.bf16 %v903, %v903
    %909 = vrot.lane.b32.xlu0 %v798, 120
    %v910 = vpop.permute.xlu0 %909
    %911 = vrot.lane.b32.xlu0 %v798, 88
    %v912 = vpop.permute.xlu0 %911
    %v914 = vsel %vm170, %v910, 0
    %v917 = vsel %vm170, %v912, 0
    %919 = vmatprep.subr.bf16.mxu0 0
    %920 = vmatpush1.bf16.xpose.msra.mxu0 %v917
    %921 = vmatprep.subr.bf16.mxu0 0
    %922 = vmatpush1.bf16.xpose.msra.mxu0 0
    %923 = vmatprep.subr.bf16.mxu0 0
    %924 = vmatpush1.bf16.xpose.msra.mxu0 0
    %925 = vmatprep.subr.bf16.mxu0 0
    %926 = vmatpush1.bf16.xpose.msra.mxu0 0
    %927 = vmatprep.subr.bf16.mxu0 0
    %928 = vmatpush1.bf16.xpose.msra.mxu0 0
    %929 = vmatprep.subr.bf16.mxu0 0
    %930 = vmatpush1.bf16.xpose.msra.mxu0 0
    %931 = vmatprep.subr.bf16.mxu0 0
    %932 = vmatpush1.bf16.xpose.msra.mxu0 0
    %933 = vmatprep.subr.bf16.mxu0 0
    %934 = vmatpush1.bf16.xpose.msra.mxu0 0
    %935 = vmatprep.subr.bf16.mxu0 0
    %936 = vmatpush1.bf16.xpose.msra.mxu0 0
    %937 = vmatprep.subr.bf16.mxu0 0
    %938 = vmatpush1.bf16.xpose.msra.mxu0 0
    %939 = vmatprep.subr.bf16.mxu0 0
    %940 = vmatpush1.bf16.xpose.msra.mxu0 0
    %941 = vmatprep.subr.bf16.mxu0 0
    %942 = vmatpush1.bf16.xpose.msra.mxu0 0
    %943 = vmatprep.subr.bf16.mxu0 0
    %944 = vmatpush1.bf16.xpose.msra.mxu0 0
    %945 = vmatprep.subr.bf16.mxu0 0
    %946 = vmatpush1.bf16.xpose.msra.mxu0 0
    %947 = vmatprep.subr.bf16.mxu0 0
    %948 = vmatpush1.bf16.xpose.msra.mxu0 0
    %949 = vmatprep.subr.bf16.mxu0 0
    %950 = vmatpush1.bf16.xpose.msra.mxu0 0
    %951 = vmatprep.mubr.bf16.mxu0 0
    %952 = vmatmul.mubr.bf16.gmra.mrb[0].mxu0 %v914
    %v953 = vpop.f32.mrb[0].mxu0
    %v954 = vadd.f32 0.0, %v953
    %v955 = vpop.f32.mrb[0].mxu0
    %v956 = vpop.f32.mrb[0].mxu0
    %v957 = vpop.f32.mrb[0].mxu0
    %958 = vdwg.mxu0
    %v959 = vsel %vm170, %v954, -inf
    %960 = vmax.xlane.f32.xlu0 %v959
    %v961 = vpop.xlane.xlu0 %960
    %v962 = vsub.f32 %v954, %v961
    %v963 = vmul.f32 %v962, 1.442695
    %v964 = vpow.pop %v963
    %v965 = vsel %vm170, %v964, 0.0
    %966 = vadd.xlane.f32.xlu0 %v965
    %v967 = vpop.xlane.xlu0 %966
    %v968 = vrcp.pop %v967
    %v969 = vmul.f32 %v964, %v968
    %v970 = vpack.c.bf16 %v969, %v969
    %971 = vrot.lane.b32.xlu0 %v798, 56
    %v972 = vpop.permute.xlu0 %971
    %v974 = vsel %vm170, %v970, 0
    %v977 = vsel %vm234, %v972, 0
    %979 = vmatprep.subr.bf16.mxu0 0
    %980 = vmatpush1.bf16.msra.mxu0 %v977
    %981 = vmatprep.subr.bf16.mxu0 0
    %982 = vmatpush1.bf16.msra.mxu0 0
    %983 = vmatprep.subr.bf16.mxu0 0
    %984 = vmatpush1.bf16.msra.mxu0 0
    %985 = vmatprep.subr.bf16.mxu0 0
    %986 = vmatpush1.bf16.msra.mxu0 0
    %987 = vmatprep.subr.bf16.mxu0 0
    %988 = vmatpush1.bf16.msra.mxu0 0
    %989 = vmatprep.subr.bf16.mxu0 0
    %990 = vmatpush1.bf16.msra.mxu0 0
    %991 = vmatprep.subr.bf16.mxu0 0
    %992 = vmatpush1.bf16.msra.mxu0 0
    %993 = vmatprep.subr.bf16.mxu0 0
    %994 = vmatpush1.bf16.msra.mxu0 0
    %995 = vmatprep.subr.bf16.mxu0 0
    %996 = vmatpush1.bf16.msra.mxu0 0
    %997 = vmatprep.subr.bf16.mxu0 0
    %998 = vmatpush1.bf16.msra.mxu0 0
    %999 = vmatprep.subr.bf16.mxu0 0
    %1000 = vmatpush1.bf16.msra.mxu0 0
    %1001 = vmatprep.subr.bf16.mxu0 0
    %1002 = vmatpush1.bf16.msra.mxu0 0
    %1003 = vmatprep.subr.bf16.mxu0 0
    %1004 = vmatpush1.bf16.msra.mxu0 0
    %1005 = vmatprep.subr.bf16.mxu0 0
    %1006 = vmatpush1.bf16.msra.mxu0 0
    %1007 = vmatprep.subr.bf16.mxu0 0
    %1008 = vmatpush1.bf16.msra.mxu0 0
    %1009 = vmatprep.subr.bf16.mxu0 0
    %1010 = vmatpush1.bf16.msra.mxu0 0
    %1011 = vmatprep.mubr.bf16.mxu0 0
    %1012 = vmatmul.mubr.bf16.gmra.mrb[0].mxu0 %v974
    %v1013 = vpop.f32.mrb[0].mxu0
    %v1014 = vadd.f32 0.0, %v1013
    %v1015 = vpop.f32.mrb[0].mxu0
    %v1016 = vpop.f32.mrb[0].mxu0
    %v1017 = vpop.f32.mrb[0].mxu0
    %1018 = vdwg.mxu0
    %v1019 = vpack.c.bf16 %v1014, %v1014
    %v1021 = vsel %vm170, %v1019, 0
    %1023 = vmatprep.subr.bf16.mxu0 0
    %1024 = vmatpush1.bf16.msra.mxu0 %v394
    %1025 = vmatprep.subr.bf16.mxu0 0
    %1026 = vmatpush1.bf16.msra.mxu0 0
    %1027 = vmatprep.subr.bf16.mxu0 0
    %1028 = vmatpush1.bf16.msra.mxu0 0
    %1029 = vmatprep.subr.bf16.mxu0 0
    %1030 = vmatpush1.bf16.msra.mxu0 0
    %1031 = vmatprep.subr.bf16.mxu0 0
    %1032 = vmatpush1.bf16.msra.mxu0 0
    %1033 = vmatprep.subr.bf16.mxu0 0
    %1034 = vmatpush1.bf16.msra.mxu0 0
    %1035 = vmatprep.subr.bf16.mxu0 0
    %1036 = vmatpush1.bf16.msra.mxu0 0
    %1037 = vmatprep.subr.bf16.mxu0 0
    %1038 = vmatpush1.bf16.msra.mxu0 0
    %1039 = vmatprep.subr.bf16.mxu0 0
    %1040 = vmatpush1.bf16.msra.mxu0 0
    %1041 = vmatprep.subr.bf16.mxu0 0
    %1042 = vmatpush1.bf16.msra.mxu0 0
    %1043 = vmatprep.subr.bf16.mxu0 0
    %1044 = vmatpush1.bf16.msra.mxu0 0
    %1045 = vmatprep.subr.bf16.mxu0 0
    %1046 = vmatpush1.bf16.msra.mxu0 0
    %1047 = vmatprep.subr.bf16.mxu0 0
    %1048 = vmatpush1.bf16.msra.mxu0 0
    %1049 = vmatprep.subr.bf16.mxu0 0
    %1050 = vmatpush1.bf16.msra.mxu0 0
    %1051 = vmatprep.subr.bf16.mxu0 0
    %1052 = vmatpush1.bf16.msra.mxu0 0
    %1053 = vmatprep.subr.bf16.mxu0 0
    %1054 = vmatpush1.bf16.msra.mxu0 0
    %1055 = vmatprep.mubr.bf16.mxu0 0
    %1056 = vmatmul.mubr.bf16.gmra.mrb[0].mxu0 %v1021
    %v1057 = vpop.f32.mrb[0].mxu0
    %v1058 = vadd.f32 0.0, %v1057
    %v1059 = vpop.f32.mrb[0].mxu0
    %v1060 = vpop.f32.mrb[0].mxu0
    %v1061 = vpop.f32.mrb[0].mxu0
    %1062 = vdwg.mxu0
    %v1064 = vsel %vm170, %v908, 0
    %1066 = vmatprep.subr.bf16.mxu0 0
    %1067 = vmatpush1.bf16.msra.mxu0 %v440
    %1068 = vmatprep.subr.bf16.mxu0 0
    %1069 = vmatpush1.bf16.msra.mxu0 0
    %1070 = vmatprep.subr.bf16.mxu0 0
    %1071 = vmatpush1.bf16.msra.mxu0 0
    %1072 = vmatprep.subr.bf16.mxu0 0
    %1073 = vmatpush1.bf16.msra.mxu0 0
    %1074 = vmatprep.subr.bf16.mxu0 0
    %1075 = vmatpush1.bf16.msra.mxu0 0
    %1076 = vmatprep.subr.bf16.mxu0 0
    %1077 = vmatpush1.bf16.msra.mxu0 0
    %1078 = vmatprep.subr.bf16.mxu0 0
    %1079 = vmatpush1.bf16.msra.mxu0 0
    %1080 = vmatprep.subr.bf16.mxu0 0
    %1081 = vmatpush1.bf16.msra.mxu0 0
    %1082 = vmatprep.subr.bf16.mxu0 0
    %1083 = vmatpush1.bf16.msra.mxu0 0
    %1084 = vmatprep.subr.bf16.mxu0 0
    %1085 = vmatpush1.bf16.msra.mxu0 0
    %1086 = vmatprep.subr.bf16.mxu0 0
    %1087 = vmatpush1.bf16.msra.mxu0 0
    %1088 = vmatprep.subr.bf16.mxu0 0
    %1089 = vmatpush1.bf16.msra.mxu0 0
    %1090 = vmatprep.subr.bf16.mxu0 0
    %1091 = vmatpush1.bf16.msra.mxu0 0
    %1092 = vmatprep.subr.bf16.mxu0 0
    %1093 = vmatpush1.bf16.msra.mxu0 0
    %1094 = vmatprep.subr.bf16.mxu0 0
    %1095 = vmatpush1.bf16.msra.mxu0 0
    %1096 = vmatprep.subr.bf16.mxu0 0
    %1097 = vmatpush1.bf16.msra.mxu0 0
    %1098 = vmatprep.mubr.bf16.mxu0 0
    %1099 = vmatmul.mubr.bf16.gmra.mrb[0].mxu0 %v1064
    %v1100 = vpop.f32.mrb[0].mxu0
    %v1101 = vadd.f32 %v1058, %v1100
    %v1102 = vpop.f32.mrb[0].mxu0
    %v1103 = vpop.f32.mrb[0].mxu0
    %v1104 = vpop.f32.mrb[0].mxu0
    %1105 = vdwg.mxu0
    %1106 = vrot.lane.b32.xlu0 %v798, 112
    %v1107 = vpop.permute.xlu0 %1106
    %1108 = vrot.lane.b32.xlu0 %v798, 80
    %v1109 = vpop.permute.xlu0 %1108
    %v1111 = vsel %vm170, %v1107, 0
    %v1114 = vsel %vm170, %v1109, 0
    %1116 = vmatprep.subr.bf16.mxu0 0
    %1117 = vmatpush1.bf16.xpose.msra.mxu0 %v1114
    %1118 = vmatprep.subr.bf16.mxu0 0
    %1119 = vmatpush1.bf16.xpose.msra.mxu0 0
    %1120 = vmatprep.subr.bf16.mxu0 0
    %1121 = vmatpush1.bf16.xpose.msra.mxu0 0
    %1122 = vmatprep.subr.bf16.mxu0 0
    %1123 = vmatpush1.bf16.xpose.msra.mxu0 0
    %1124 = vmatprep.subr.bf16.mxu0 0
    %1125 = vmatpush1.bf16.xpose.msra.mxu0 0
    %1126 = vmatprep.subr.bf16.mxu0 0
    %1127 = vmatpush1.bf16.xpose.msra.mxu0 0
    %1128 = vmatprep.subr.bf16.mxu0 0
    %1129 = vmatpush1.bf16.xpose.msra.mxu0 0
    %1130 = vmatprep.subr.bf16.mxu0 0
    %1131 = vmatpush1.bf16.xpose.msra.mxu0 0
    %1132 = vmatprep.subr.bf16.mxu0 0
    %1133 = vmatpush1.bf16.xpose.msra.mxu0 0
    %1134 = vmatprep.subr.bf16.mxu0 0
    %1135 = vmatpush1.bf16.xpose.msra.mxu0 0
    %1136 = vmatprep.subr.bf16.mxu0 0
    %1137 = vmatpush1.bf16.xpose.msra.mxu0 0
    %1138 = vmatprep.subr.bf16.mxu0 0
    %1139 = vmatpush1.bf16.xpose.msra.mxu0 0
    %1140 = vmatprep.subr.bf16.mxu0 0
    %1141 = vmatpush1.bf16.xpose.msra.mxu0 0
    %1142 = vmatprep.subr.bf16.mxu0 0
    %1143 = vmatpush1.bf16.xpose.msra.mxu0 0
    %1144 = vmatprep.subr.bf16.mxu0 0
    %1145 = vmatpush1.bf16.xpose.msra.mxu0 0
    %1146 = vmatprep.subr.bf16.mxu0 0
    %1147 = vmatpush1.bf16.xpose.msra.mxu0 0
    %1148 = vmatprep.mubr.bf16.mxu0 0
    %1149 = vmatmul.mubr.bf16.gmra.mrb[0].mxu0 %v1111
    %v1150 = vpop.f32.mrb[0].mxu0
    %v1151 = vadd.f32 0.0, %v1150
    %v1152 = vpop.f32.mrb[0].mxu0
    %v1153 = vpop.f32.mrb[0].mxu0
    %v1154 = vpop.f32.mrb[0].mxu0
    %1155 = vdwg.mxu0
    %v1156 = vsel %vm170, %v1151, -inf
    %1157 = vmax.xlane.f32.xlu0 %v1156
    %v1158 = vpop.xlane.xlu0 %1157
    %v1159 = vsub.f32 %v1151, %v1158
    %v1160 = vmul.f32 %v1159, 1.442695
    %v1161 = vpow.pop %v1160
    %v1162 = vsel %vm170, %v1161, 0.0
    %1163 = vadd.xlane.f32.xlu0 %v1162
    %v1164 = vpop.xlane.xlu0 %1163
    %v1165 = vrcp.pop %v1164
    %v1166 = vmul.f32 %v1161, %v1165
    %v1167 = vpack.c.bf16 %v1166, %v1166
    %1168 = vrot.lane.b32.xlu0 %v798, 48
    %v1169 = vpop.permute.xlu0 %1168
    %v1171 = vsel %vm170, %v1167, 0
    %v1174 = vsel %vm234, %v1169, 0
    %1176 = vmatprep.subr.bf16.mxu0 0
    %1177 = vmatpush1.bf16.msra.mxu0 %v1174
    %1178 = vmatprep.subr.bf16.mxu0 0
    %1179 = vmatpush1.bf16.msra.mxu0 0
    %1180 = vmatprep.subr.bf16.mxu0 0
    %1181 = vmatpush1.bf16.msra.mxu0 0
    %1182 = vmatprep.subr.bf16.mxu0 0
    %1183 = vmatpush1.bf16.msra.mxu0 0
    %1184 = vmatprep.subr.bf16.mxu0 0
    %1185 = vmatpush1.bf16.msra.mxu0 0
    %1186 = vmatprep.subr.bf16.mxu0 0
    %1187 = vmatpush1.bf16.msra.mxu0 0
    %1188 = vmatprep.subr.bf16.mxu0 0
    %1189 = vmatpush1.bf16.msra.mxu0 0
    %1190 = vmatprep.subr.bf16.mxu0 0
    %1191 = vmatpush1.bf16.msra.mxu0 0
    %1192 = vmatprep.subr.bf16.mxu0 0
    %1193 = vmatpush1.bf16.msra.mxu0 0
    %1194 = vmatprep.subr.bf16.mxu0 0
    %1195 = vmatpush1.bf16.msra.mxu0 0
    %1196 = vmatprep.subr.bf16.mxu0 0
    %1197 = vmatpush1.bf16.msra.mxu0 0
    %1198 = vmatprep.subr.bf16.mxu0 0
    %1199 = vmatpush1.bf16.msra.mxu0 0
    %1200 = vmatprep.subr.bf16.mxu0 0
    %1201 = vmatpush1.bf16.msra.mxu0 0
    %1202 = vmatprep.subr.bf16.mxu0 0
    %1203 = vmatpush1.bf16.msra.mxu0 0
    %1204 = vmatprep.subr.bf16.mxu0 0
    %1205 = vmatpush1.bf16.msra.mxu0 0
    %1206 = vmatprep.subr.bf16.mxu0 0
    %1207 = vmatpush1.bf16.msra.mxu0 0
    %1208 = vmatprep.mubr.bf16.mxu0 0
    %1209 = vmatmul.mubr.bf16.gmra.mrb[0].mxu0 %v1171
    %v1210 = vpop.f32.mrb[0].mxu0
    %v1211 = vadd.f32 0.0, %v1210
    %v1212 = vpop.f32.mrb[0].mxu0
    %v1213 = vpop.f32.mrb[0].mxu0
    %v1214 = vpop.f32.mrb[0].mxu0
    %1215 = vdwg.mxu0
    %v1216 = vpack.c.bf16 %v1211, %v1211
    %v1218 = vsel %vm170, %v1216, 0
    %1220 = vmatprep.subr.bf16.mxu0 0
    %1221 = vmatpush1.bf16.msra.mxu0 %v597
    %1222 = vmatprep.subr.bf16.mxu0 0
    %1223 = vmatpush1.bf16.msra.mxu0 0
    %1224 = vmatprep.subr.bf16.mxu0 0
    %1225 = vmatpush1.bf16.msra.mxu0 0
    %1226 = vmatprep.subr.bf16.mxu0 0
    %1227 = vmatpush1.bf16.msra.mxu0 0
    %1228 = vmatprep.subr.bf16.mxu0 0
    %1229 = vmatpush1.bf16.msra.mxu0 0
    %1230 = vmatprep.subr.bf16.mxu0 0
    %1231 = vmatpush1.bf16.msra.mxu0 0
    %1232 = vmatprep.subr.bf16.mxu0 0
    %1233 = vmatpush1.bf16.msra.mxu0 0
    %1234 = vmatprep.subr.bf16.mxu0 0
    %1235 = vmatpush1.bf16.msra.mxu0 0
    %1236 = vmatprep.subr.bf16.mxu0 0
    %1237 = vmatpush1.bf16.msra.mxu0 0
    %1238 = vmatprep.subr.bf16.mxu0 0
    %1239 = vmatpush1.bf16.msra.mxu0 0
    %1240 = vmatprep.subr.bf16.mxu0 0
    %1241 = vmatpush1.bf16.msra.mxu0 0
    %1242 = vmatprep.subr.bf16.mxu0 0
    %1243 = vmatpush1.bf16.msra.mxu0 0
    %1244 = vmatprep.subr.bf16.mxu0 0
    %1245 = vmatpush1.bf16.msra.mxu0 0
    %1246 = vmatprep.subr.bf16.mxu0 0
    %1247 = vmatpush1.bf16.msra.mxu0 0
    %1248 = vmatprep.subr.bf16.mxu0 0
    %1249 = vmatpush1.bf16.msra.mxu0 0
    %1250 = vmatprep.subr.bf16.mxu0 0
    %1251 = vmatpush1.bf16.msra.mxu0 0
    %1252 = vmatprep.mubr.bf16.mxu0 0
    %1253 = vmatmul.mubr.bf16.gmra.mrb[0].mxu0 %v1218
    %v1254 = vpop.f32.mrb[0].mxu0
    %v1255 = vadd.f32 0.0, %v1254
    %v1256 = vpop.f32.mrb[0].mxu0
    %v1257 = vpop.f32.mrb[0].mxu0
    %v1258 = vpop.f32.mrb[0].mxu0
    %1259 = vdwg.mxu0
    %v1260 = vadd.f32 %v1101, %v1255
    %1261 = vrot.lane.b32.xlu0 %v798, 104
    %v1262 = vpop.permute.xlu0 %1261
    %1263 = vrot.lane.b32.xlu0 %v798, 72
    %v1264 = vpop.permute.xlu0 %1263
    %v1266 = vsel %vm170, %v1262, 0
    %v1269 = vsel %vm170, %v1264, 0
    %1271 = vmatprep.subr.bf16.mxu0 0
    %1272 = vmatpush1.bf16.xpose.msra.mxu0 %v1269
    %1273 = vmatprep.subr.bf16.mxu0 0
    %1274 = vmatpush1.bf16.xpose.msra.mxu0 0
    %1275 = vmatprep.subr.bf16.mxu0 0
    %1276 = vmatpush1.bf16.xpose.msra.mxu0 0
    %1277 = vmatprep.subr.bf16.mxu0 0
    %1278 = vmatpush1.bf16.xpose.msra.mxu0 0
    %1279 = vmatprep.subr.bf16.mxu0 0
    %1280 = vmatpush1.bf16.xpose.msra.mxu0 0
    %1281 = vmatprep.subr.bf16.mxu0 0
    %1282 = vmatpush1.bf16.xpose.msra.mxu0 0
    %1283 = vmatprep.subr.bf16.mxu0 0
    %1284 = vmatpush1.bf16.xpose.msra.mxu0 0
    %1285 = vmatprep.subr.bf16.mxu0 0
    %1286 = vmatpush1.bf16.xpose.msra.mxu0 0
    %1287 = vmatprep.subr.bf16.mxu0 0
    %1288 = vmatpush1.bf16.xpose.msra.mxu0 0
    %1289 = vmatprep.subr.bf16.mxu0 0
    %1290 = vmatpush1.bf16.xpose.msra.mxu0 0
    %1291 = vmatprep.subr.bf16.mxu0 0
    %1292 = vmatpush1.bf16.xpose.msra.mxu0 0
    %1293 = vmatprep.subr.bf16.mxu0 0
    %1294 = vmatpush1.bf16.xpose.msra.mxu0 0
    %1295 = vmatprep.subr.bf16.mxu0 0
    %1296 = vmatpush1.bf16.xpose.msra.mxu0 0
    %1297 = vmatprep.subr.bf16.mxu0 0
    %1298 = vmatpush1.bf16.xpose.msra.mxu0 0
    %1299 = vmatprep.subr.bf16.mxu0 0
    %1300 = vmatpush1.bf16.xpose.msra.mxu0 0
    %1301 = vmatprep.subr.bf16.mxu0 0
    %1302 = vmatpush1.bf16.xpose.msra.mxu0 0
    %1303 = vmatprep.mubr.bf16.mxu0 0
    %1304 = vmatmul.mubr.bf16.gmra.mrb[0].mxu0 %v1266
    %v1305 = vpop.f32.mrb[0].mxu0
    %v1306 = vadd.f32 0.0, %v1305
    %v1307 = vpop.f32.mrb[0].mxu0
    %v1308 = vpop.f32.mrb[0].mxu0
    %v1309 = vpop.f32.mrb[0].mxu0
    %1310 = vdwg.mxu0
    %v1311 = vsel %vm170, %v1306, -inf
    %1312 = vmax.xlane.f32.xlu0 %v1311
    %v1313 = vpop.xlane.xlu0 %1312
    %v1314 = vsub.f32 %v1306, %v1313
    %v1315 = vmul.f32 %v1314, 1.442695
    %v1316 = vpow.pop %v1315
    %v1317 = vsel %vm170, %v1316, 0.0
    %1318 = vadd.xlane.f32.xlu0 %v1317
    %v1319 = vpop.xlane.xlu0 %1318
    %v1320 = vrcp.pop %v1319
    %v1321 = vmul.f32 %v1316, %v1320
    %v1322 = vpack.c.bf16 %v1321, %v1321
    %1323 = vrot.lane.b32.xlu0 %v798, 40
    %v1324 = vpop.permute.xlu0 %1323
    %v1326 = vsel %vm170, %v1322, 0
    %v1329 = vsel %vm234, %v1324, 0
    %1331 = vmatprep.subr.bf16.mxu0 0
    %1332 = vmatpush1.bf16.msra.mxu0 %v1329
    %1333 = vmatprep.subr.bf16.mxu0 0
    %1334 = vmatpush1.bf16.msra.mxu0 0
    %1335 = vmatprep.subr.bf16.mxu0 0
    %1336 = vmatpush1.bf16.msra.mxu0 0
    %1337 = vmatprep.subr.bf16.mxu0 0
    %1338 = vmatpush1.bf16.msra.mxu0 0
    %1339 = vmatprep.subr.bf16.mxu0 0
    %1340 = vmatpush1.bf16.msra.mxu0 0
    %1341 = vmatprep.subr.bf16.mxu0 0
    %1342 = vmatpush1.bf16.msra.mxu0 0
    %1343 = vmatprep.subr.bf16.mxu0 0
    %1344 = vmatpush1.bf16.msra.mxu0 0
    %1345 = vmatprep.subr.bf16.mxu0 0
    %1346 = vmatpush1.bf16.msra.mxu0 0
    %1347 = vmatprep.subr.bf16.mxu0 0
    %1348 = vmatpush1.bf16.msra.mxu0 0
    %1349 = vmatprep.subr.bf16.mxu0 0
    %1350 = vmatpush1.bf16.msra.mxu0 0
    %1351 = vmatprep.subr.bf16.mxu0 0
    %1352 = vmatpush1.bf16.msra.mxu0 0
    %1353 = vmatprep.subr.bf16.mxu0 0
    %1354 = vmatpush1.bf16.msra.mxu0 0
    %1355 = vmatprep.subr.bf16.mxu0 0
    %1356 = vmatpush1.bf16.msra.mxu0 0
    %1357 = vmatprep.subr.bf16.mxu0 0
    %1358 = vmatpush1.bf16.msra.mxu0 0
    %1359 = vmatprep.subr.bf16.mxu0 0
    %1360 = vmatpush1.bf16.msra.mxu0 0
    %1361 = vmatprep.subr.bf16.mxu0 0
    %1362 = vmatpush1.bf16.msra.mxu0 0
    %1363 = vmatprep.mubr.bf16.mxu0 0
    %1364 = vmatmul.mubr.bf16.gmra.mrb[0].mxu0 %v1326
    %v1365 = vpop.f32.mrb[0].mxu0
    %v1366 = vadd.f32 0.0, %v1365
    %v1367 = vpop.f32.mrb[0].mxu0
    %v1368 = vpop.f32.mrb[0].mxu0
    %v1369 = vpop.f32.mrb[0].mxu0
    %1370 = vdwg.mxu0
    %v1371 = vpack.c.bf16 %v1366, %v1366
    %v1373 = vsel %vm170, %v1371, 0
    %1375 = vmatprep.subr.bf16.mxu0 0
    %1376 = vmatpush1.bf16.msra.mxu0 %v755
    %1377 = vmatprep.subr.bf16.mxu0 0
    %1378 = vmatpush1.bf16.msra.mxu0 0
    %1379 = vmatprep.subr.bf16.mxu0 0
    %1380 = vmatpush1.bf16.msra.mxu0 0
    %1381 = vmatprep.subr.bf16.mxu0 0
    %1382 = vmatpush1.bf16.msra.mxu0 0
    %1383 = vmatprep.subr.bf16.mxu0 0
    %1384 = vmatpush1.bf16.msra.mxu0 0
    %1385 = vmatprep.subr.bf16.mxu0 0
    %1386 = vmatpush1.bf16.msra.mxu0 0
    %1387 = vmatprep.subr.bf16.mxu0 0
    %1388 = vmatpush1.bf16.msra.mxu0 0
    %1389 = vmatprep.subr.bf16.mxu0 0
    %1390 = vmatpush1.bf16.msra.mxu0 0
    %1391 = vmatprep.subr.bf16.mxu0 0
    %1392 = vmatpush1.bf16.msra.mxu0 0
    %1393 = vmatprep.subr.bf16.mxu0 0
    %1394 = vmatpush1.bf16.msra.mxu0 0
    %1395 = vmatprep.subr.bf16.mxu0 0
    %1396 = vmatpush1.bf16.msra.mxu0 0
    %1397 = vmatprep.subr.bf16.mxu0 0
    %1398 = vmatpush1.bf16.msra.mxu0 0
    %1399 = vmatprep.subr.bf16.mxu0 0
    %1400 = vmatpush1.bf16.msra.mxu0 0
    %1401 = vmatprep.subr.bf16.mxu0 0
    %1402 = vmatpush1.bf16.msra.mxu0 0
    %1403 = vmatprep.subr.bf16.mxu0 0
    %1404 = vmatpush1.bf16.msra.mxu0 0
    %1405 = vmatprep.subr.bf16.mxu0 0
    %1406 = vmatpush1.bf16.msra.mxu0 0
    %1407 = vmatprep.mubr.bf16.mxu0 0
    %1408 = vmatmul.mubr.bf16.gmra.mrb[0].mxu0 %v1373
    %v1409 = vpop.f32.mrb[0].mxu0
    %v1410 = vadd.f32 0.0, %v1409
    %v1411 = vpop.f32.mrb[0].mxu0
    %v1412 = vpop.f32.mrb[0].mxu0
    %v1413 = vpop.f32.mrb[0].mxu0
    %1414 = vdwg.mxu0
    %v1415 = vadd.f32 %v1260, %v1410
    %v1416 = vld [vmem:[%s6] sm:$0x1]
    %v1418 = vlaneseq
    %v1419 = vshrl.u32 %v1418, 7
    %v1420 = vsub.s32 0, %v1419
    %v1421 = vrot.slane %v1416, %v1420
    %v1423 = vadd.f32 %v797, %v1421
    %v1424 = vadd.f32 %v1415, %v1421
    %v1425 = vadd.f32 %v46, %v1423
    %v1426 = vadd.f32 %v47, %v1424
    %v1427 = vld [vmem:[%s7] sm:$0x1]
    %v1428 = vld [vmem:[%s8] sm:$0x1]
    %v1429 = vsel %vm50, %v1425, 0.0
    %1430 = vadd.xlane.f32.xlu0 %v1429
    %v1431 = vpop.xlane.xlu0 %1430
    %v1432 = vsel %vm50, %v1426, 0.0
    %1433 = vadd.xlane.f32.xlu0 %v1432
    %v1434 = vpop.xlane.xlu0 %1433
    %v1435 = vmul.f32 %v1431, %v57
    %v1436 = vmul.f32 %v1434, %v57
    %v1437 = vsub.f32 %v1425, %v1435
    %v1438 = vsub.f32 %v1426, %v1436
    %v1439 = vmul.f32 %v1437, %v1437
    %v1440 = vmul.f32 %v1438, %v1438
    %v1441 = vsel %vm50, %v1439, 0.0
    %1442 = vadd.xlane.f32.xlu0 %v1441
    %v1443 = vpop.xlane.xlu0 %1442
    %v1444 = vsel %vm50, %v1440, 0.0
    %1445 = vadd.xlane.f32.xlu0 %v1444
    %v1446 = vpop.xlane.xlu0 %1445
    %v1447 = vmul.f32 %v1443, %v57
    %v1448 = vmul.f32 %v1446, %v57
    %v1449 = vadd.f32 %v1447, 1e-06
    %v1450 = vadd.f32 %v1448, 1e-06
    %v1451 = vrsqrt.pop %v1449
    %v1452 = vrsqrt.pop %v1450
    %v1453 = vmul.f32 %v1437, %v1451
    %v1454 = vmul.f32 %v1438, %v1452
    %v1456 = vlaneseq
    %v1457 = vshrl.u32 %v1456, 7
    %v1458 = vsub.s32 0, %v1457
    %v1459 = vrot.slane %v1427, %v1458
    %v1461 = vmul.f32 %v1453, %v1459
    %v1462 = vmul.f32 %v1454, %v1459
    %v1464 = vlaneseq
    %v1465 = vshrl.u32 %v1464, 7
    %v1466 = vsub.s32 0, %v1465
    %v1467 = vrot.slane %v1428, %v1466
    %v1469 = vadd.f32 %v1461, %v1467
    %v1470 = vadd.f32 %v1462, %v1467
    %v1471 = vpack.c.bf16 %v1470, %v1469
    %v1472 = vld [vmem:[%s9] sm:$0xf]
    %v1473 = vld [vmem:[%s9 + $0x4] sm:$0xf]
    %v1474 = vld [vmem:[%s9 + $0x8] sm:$0xf]
    %v1475 = vld [vmem:[%s9 + $0xc] sm:$0xf]
    %v1476 = vld [vmem:[%s10] sm:$0x1]
    %v1478 = vlaneseq
    %v1479 = vshrl.u32 %v1478, 7
    %v1480 = vsub.s32 0, %v1479
    %v1481 = vrot.slane %v1476, %v1480
    %v1487 = vunpack.c.l.b16 %v1472
    %v1488 = vunpack.c.l.b16 %v1473
    %v1489 = vunpack.c.l.b16 %v1474
    %v1490 = vunpack.c.l.b16 %v1475
    %v1491 = vpack.c.b16 %v1488, %v1487
    %v1492 = vpack.c.b16 %v1490, %v1489
    %v1496 = vsel %vm50, %v1471, 0
    %1498 = vmatprep.subr.bf16.mxu0 0
    %1499 = vmatpush1.bf16.msra.mxu0 %v1491
    %1500 = vmatprep.subr.bf16.mxu0 0
    %1501 = vmatpush1.bf16.msra.mxu0 %v1492
    %1502 = vmatprep.subr.bf16.mxu0 0
    %1503 = vmatpush1.bf16.msra.mxu0 0
    %1504 = vmatprep.subr.bf16.mxu0 0
    %1505 = vmatpush1.bf16.msra.mxu0 0
    %1506 = vmatprep.subr.bf16.mxu0 0
    %1507 = vmatpush1.bf16.msra.mxu0 0
    %1508 = vmatprep.subr.bf16.mxu0 0
    %1509 = vmatpush1.bf16.msra.mxu0 0
    %1510 = vmatprep.subr.bf16.mxu0 0
    %1511 = vmatpush1.bf16.msra.mxu0 0
    %1512 = vmatprep.subr.bf16.mxu0 0
    %1513 = vmatpush1.bf16.msra.mxu0 0
    %1514 = vmatprep.subr.bf16.mxu0 0
    %1515 = vmatpush1.bf16.msra.mxu0 0
    %1516 = vmatprep.subr.bf16.mxu0 0
    %1517 = vmatpush1.bf16.msra.mxu0 0
    %1518 = vmatprep.subr.bf16.mxu0 0
    %1519 = vmatpush1.bf16.msra.mxu0 0
    %1520 = vmatprep.subr.bf16.mxu0 0
    %1521 = vmatpush1.bf16.msra.mxu0 0
    %1522 = vmatprep.subr.bf16.mxu0 0
    %1523 = vmatpush1.bf16.msra.mxu0 0
    %1524 = vmatprep.subr.bf16.mxu0 0
    %1525 = vmatpush1.bf16.msra.mxu0 0
    %1526 = vmatprep.subr.bf16.mxu0 0
    %1527 = vmatpush1.bf16.msra.mxu0 0
    %1528 = vmatprep.subr.bf16.mxu0 0
    %1529 = vmatpush1.bf16.msra.mxu0 0
    %1530 = vmatprep.mubr.bf16.mxu0 0
    %1531 = vmatmul.mubr.bf16.gmra.mrb[0].mxu0 %v1496
    %v1532 = vpop.f32.mrb[0].mxu0
    %v1533 = vadd.f32 %v1481, %v1532
    %v1534 = vpop.f32.mrb[0].mxu0
    %v1535 = vpop.f32.mrb[0].mxu0
    %v1536 = vadd.f32 %v1481, %v1535
    %v1537 = vpop.f32.mrb[0].mxu0
    %1538 = vdwg.mxu0
    %v1539 = vmul.f32 %v1533, 0.5
    %v1540 = vmul.f32 %v1536, 0.5
    %v1541 = vmul.f32 %v1533, 0.70710677
    %v1542 = vmul.f32 %v1536, 0.70710677
    %v1543 = verf.f32.pop %v1541
    %v1544 = verf.f32.pop %v1542
    %v1545 = vadd.f32 %v1543, 1.0
    %v1546 = vadd.f32 %v1544, 1.0
    %v1547 = vmul.f32 %v1539, %v1545
    %v1548 = vmul.f32 %v1540, %v1546
    %v1549 = vpack.c.bf16 %v1548, %v1547
    %v1550 = vld [vmem:[%s11] sm:$0xf]
    %v1551 = vld [vmem:[%s11 + $0x4] sm:$0xf]
    %v1552 = vld [vmem:[%s11 + $0x8] sm:$0xf]
    %v1553 = vld [vmem:[%s11 + $0xc] sm:$0xf]
    %v1554 = vld [vmem:[%s11 + $0x10] sm:$0xf]
    %v1555 = vld [vmem:[%s11 + $0x14] sm:$0xf]
    %v1556 = vld [vmem:[%s11 + $0x18] sm:$0xf]
    %v1557 = vld [vmem:[%s11 + $0x1c] sm:$0xf]
    %v1558 = vld [vmem:[%s11 + $0x20] sm:$0xf]
    %v1559 = vld [vmem:[%s11 + $0x24] sm:$0xf]
    %v1560 = vld [vmem:[%s11 + $0x28] sm:$0xf]
    %v1561 = vld [vmem:[%s11 + $0x2c] sm:$0xf]
    %v1562 = vld [vmem:[%s11 + $0x30] sm:$0xf]
    %v1563 = vld [vmem:[%s11 + $0x34] sm:$0xf]
    %v1564 = vld [vmem:[%s11 + $0x38] sm:$0xf]
    %v1565 = vld [vmem:[%s11 + $0x3c] sm:$0xf]
    %v1566 = vld [vmem:[%s12] sm:$0x1]
    %v1568 = vlaneseq
    %v1569 = vshrl.u32 %v1568, 7
    %v1570 = vsub.s32 0, %v1569
    %v1571 = vrot.slane %v1566, %v1570
    %v1589 = vunpack.c.l.b16 %v1550
    %v1590 = vunpack.c.l.b16 %v1551
    %v1591 = vunpack.c.l.b16 %v1552
    %v1592 = vunpack.c.l.b16 %v1553
    %v1593 = vunpack.c.l.b16 %v1554
    %v1594 = vunpack.c.l.b16 %v1555
    %v1595 = vunpack.c.l.b16 %v1556
    %v1596 = vunpack.c.l.b16 %v1557
    %v1597 = vunpack.c.l.b16 %v1558
    %v1598 = vunpack.c.l.b16 %v1559
    %v1599 = vunpack.c.l.b16 %v1560
    %v1600 = vunpack.c.l.b16 %v1561
    %v1601 = vunpack.c.l.b16 %v1562
    %v1602 = vunpack.c.l.b16 %v1563
    %v1603 = vunpack.c.l.b16 %v1564
    %v1604 = vunpack.c.l.b16 %v1565
    %v1605 = vpack.c.b16 %v1590, %v1589
    %v1606 = vpack.c.b16 %v1592, %v1591
    %v1607 = vpack.c.b16 %v1594, %v1593
    %v1608 = vpack.c.b16 %v1596, %v1595
    %v1609 = vpack.c.b16 %v1598, %v1597
    %v1610 = vpack.c.b16 %v1600, %v1599
    %v1611 = vpack.c.b16 %v1602, %v1601
    %v1612 = vpack.c.b16 %v1604, %v1603
    %1621 = vmatprep.subr.bf16.mxu0 0
    %1622 = vmatpush1.bf16.msra.mxu0 %v1605
    %1623 = vmatprep.subr.bf16.mxu0 0
    %1624 = vmatpush1.bf16.msra.mxu0 %v1606
    %1625 = vmatprep.subr.bf16.mxu0 0
    %1626 = vmatpush1.bf16.msra.mxu0 %v1607
    %1627 = vmatprep.subr.bf16.mxu0 0
    %1628 = vmatpush1.bf16.msra.mxu0 %v1608
    %1629 = vmatprep.subr.bf16.mxu0 0
    %1630 = vmatpush1.bf16.msra.mxu0 %v1609
    %1631 = vmatprep.subr.bf16.mxu0 0
    %1632 = vmatpush1.bf16.msra.mxu0 %v1610
    %1633 = vmatprep.subr.bf16.mxu0 0
    %1634 = vmatpush1.bf16.msra.mxu0 %v1611
    %1635 = vmatprep.subr.bf16.mxu0 0
    %1636 = vmatpush1.bf16.msra.mxu0 %v1612
    %1637 = vmatprep.subr.bf16.mxu0 0
    %1638 = vmatpush1.bf16.msra.mxu0 0
    %1639 = vmatprep.subr.bf16.mxu0 0
    %1640 = vmatpush1.bf16.msra.mxu0 0
    %1641 = vmatprep.subr.bf16.mxu0 0
    %1642 = vmatpush1.bf16.msra.mxu0 0
    %1643 = vmatprep.subr.bf16.mxu0 0
    %1644 = vmatpush1.bf16.msra.mxu0 0
    %1645 = vmatprep.subr.bf16.mxu0 0
    %1646 = vmatpush1.bf16.msra.mxu0 0
    %1647 = vmatprep.subr.bf16.mxu0 0
    %1648 = vmatpush1.bf16.msra.mxu0 0
    %1649 = vmatprep.subr.bf16.mxu0 0
    %1650 = vmatpush1.bf16.msra.mxu0 0
    %1651 = vmatprep.subr.bf16.mxu0 0
    %1652 = vmatpush1.bf16.msra.mxu0 0
    %1653 = vmatprep.mubr.bf16.mxu0 0
    %1654 = vmatmul.mubr.bf16.gmra.mrb[0].mxu0 %v1549
    %v1655 = vpop.f32.mrb[0].mxu0
    %v1656 = vadd.f32 %v1571, %v1655
    %v1657 = vpop.f32.mrb[0].mxu0
    %v1658 = vpop.f32.mrb[0].mxu0
    %v1659 = vadd.f32 %v1571, %v1658
    %v1660 = vpop.f32.mrb[0].mxu0
    %1661 = vdwg.mxu0
    %v1662 = vadd.f32 %v1425, %v1656
    %v1663 = vadd.f32 %v1426, %v1659
    %1664 = vst.msk [vmem:[#allocation2] sm:$0xff] %vm50, %v1662
    %1665 = vst.msk [vmem:[#allocation2 + $0x8] sm:$0xff] %vm50, %v1663
    // Predicated region
    $region54: #{tpu_custom_call.1} parent=1 // pred_check
      _
    $region55: #{tpu_custom_call.1} parent=1 // pred_check_branch
      %1667 = sbr.rel (0) target = $region57
    $region56: #{tpu_custom_call.1} parent=1 // pred_region
      %s1669 = ssub.s32 256, 256
      %1670 = vsyncadd [#allocation3], %s1669
      %s1671 = sshll.u32 [#allocation2], 4
      %s1672 = int_to_ptr.vmem [resolvable:$true] %s1671
      %1677 = dma.vmem_to_hbm [thread:$0]  %s1672, 256, %s13, [#allocation3], 128, 128, 8
    $region57: #{tpu_custom_call.1} parent=1 // pred_fallthru
      _
    // Predicated region
    $region58: #{tpu_custom_call.1} parent=1 // pred_check
      _
    $region59: #{tpu_custom_call.1} parent=1 // pred_check_branch
      %1679 = sbr.rel (0) target = $region61
    $region60: #{tpu_custom_call.1} parent=1 // pred_region
      %1680 = dma.done [#allocation3], 256
    $region61: #{tpu_custom_call.1} parent=1 // pred_fallthru
      _
    %1681 = vsyncpa [#allocation3], 1

</llo_original>
